<compile_context>
chip_gen: v7x
topology: tpu7x:2x2x1
jax: 0.10.0
libtpu: 0.0.40
codegen_flags: <defaults>
</compile_context>

<pallas_src>
import math
from functools import partial

import jax
import jax.numpy as jnp
from jax.experimental import pallas as pl
from jax.experimental.pallas import tpu as pltpu


def encoder_layer_kernel(src_ref, mask_ref, wqkv_ref, bqkv_ref, wo_ref, pk_ref,
                         w1_ref, b1_ref, w2_ref, out_ref, *, heads):
    L, D = src_ref.shape          # one batch element: (seq_len, embed_dim)
    dh = D // heads
    f32 = jnp.float32

    x = src_ref[...]                                                    # (L, D)

    # ---- fused QKV projection: one MXU matmul (1/sqrt(dh) pre-folded into Wq) ----
    qkv = jnp.dot(x, wqkv_ref[...], preferred_element_type=f32) + bqkv_ref[...]  # (L, 3D)

    # torch-style (query, key) mask table, shared across batch & heads
    mask = mask_ref[...]                                                # (L, L) int32
    neg = jnp.float32(-1e10)

    pk = pk_ref[...]                                                    # (4, D) packed
    bo, ln_g, ln_b, b2 = pk[0:1, :], pk[1:2, :], pk[2:3, :], pk[3:4, :]

    # ---- multi-head attention ---------------------------------------------------
    # Heads are unrolled (dh is tiny at these shapes); every matmul is a dense 2-D
    # MXU op.  Per-head contexts are concatenated ONCE and pushed through a single
    # (L, D) x (D, D) output projection (contraction K = D, not K = dh).
    ctx_heads = []
    for h in range(heads):
        q_h = qkv[:, h * dh:(h + 1) * dh]                               # (L, dh), pre-scaled
        k_h = qkv[:, D + h * dh:D + (h + 1) * dh]                       # (L, dh)
        v_h = qkv[:, 2 * D + h * dh:2 * D + (h + 1) * dh]               # (L, dh)

        energy = jnp.einsum('qd,kd->qk', q_h, k_h,
                            preferred_element_type=f32)                 # (L, L)
        energy = jnp.where(mask == 0, neg, energy)                      # masked_fill
        e = jnp.exp(energy - jnp.max(energy, axis=-1, keepdims=True))
        p = e / jnp.sum(e, axis=-1, keepdims=True)                      # exact softmax
        # dropout(attention): identity in eval mode
        ctx_heads.append(jnp.dot(p, v_h, preferred_element_type=f32))   # (L, dh)

    ctx = jnp.concatenate(ctx_heads, axis=-1)                           # (L, D)
    attn_out = jnp.dot(ctx, wo_ref[...], preferred_element_type=f32) + bo

    def layer_norm(y):            # torch nn.LayerNorm(embed_dim), eps = 1e-5
        mu = jnp.mean(y, axis=-1, keepdims=True)
        var = jnp.mean(jnp.square(y - mu), axis=-1, keepdims=True)
        return (y - mu) * jax.lax.rsqrt(var + 1e-5) * ln_g + ln_b

    # x = LN(src + dropout(self_attn(src)))          (dropout = identity)
    h1 = layer_norm(x + attn_out)

    # position-wise feed-forward (dropout = identity)
    ff = jnp.maximum(jnp.dot(h1, w1_ref[...], preferred_element_type=f32) + b1_ref[...], 0.0)
    ff = jnp.dot(ff, w2_ref[...], preferred_element_type=f32) + b2

    # x = LN(x + dropout(ff(x)))
    out_ref[...] = layer_norm(h1 + ff).astype(out_ref.dtype)


@partial(jax.jit, static_argnames=("heads",))
def encoder_layer(src, mask, params, *, heads):
    B, L, D = src.shape
    PF = params["w1"].shape[1]
    assert D % heads == 0
    # The PyTorch masked_fill broadcast treats the (B, L) mask as a (query, key)
    # table; that is only well-defined when B == L.
    assert B == L, "torch-style mask broadcast requires batch == seq_len"
    dh = D // heads
    inv_scale = 1.0 / math.sqrt(dh)

    # Host-side packing (layout plumbing, free):
    #   * fused QKV weight/bias with 1/sqrt(dh) folded into the Q columns
    #   * bo / ln_gamma / ln_beta / b2 packed into a single (4, D) operand
    w_qkv = jnp.concatenate([params["wq"] * inv_scale, params["wk"], params["wv"]], axis=1)
    b_qkv = jnp.concatenate([params["bq"] * inv_scale, params["bk"], params["bv"]], axis=1)
    packed = jnp.concatenate([params["bo"], params["ln_g"], params["ln_b"], params["b2"]], axis=0)

    def const_spec(shape):        # whole-array operand, same block every grid step
        return pl.BlockSpec(shape, lambda b: (0,) * len(shape))

    # advisory cost hint for the XLA scheduler
    flops = 2 * B * L * (D * 3 * D + heads * L * dh * 2 + D * D + 2 * D * PF)
    transcendentals = B * heads * L * L + 4 * B * L
    bytes_accessed = 4 * (src.size + mask.size + w_qkv.size + b_qkv.size +
                          params["wo"].size + packed.size + params["w1"].size +
                          params["b1"].size + params["w2"].size + B * L * D)

    out = pl.pallas_call(
        partial(encoder_layer_kernel, heads=heads),
        out_shape=jax.ShapeDtypeStruct((B, L, D), jnp.float32),
        grid_spec=pltpu.PrefetchScalarGridSpec(
            num_scalar_prefetch=0,
            grid=(B,),
            in_specs=[
                pl.BlockSpec((None, L, D), lambda b: (b, 0, 0)),   # src, per batch
                pl.BlockSpec((B, L), lambda b: (0, 0)),            # mask = (q, k) table
                const_spec((D, 3 * D)),                            # fused QKV weight
                const_spec((1, 3 * D)),                            # fused QKV bias
                const_spec((D, D)),                                # Wo
                const_spec((4, D)),                                # bo / ln_g / ln_b / b2
                const_spec((D, PF)),                               # W1
                const_spec((1, PF)),                               # b1
                const_spec((PF, D)),                               # W2
            ],
            out_specs=pl.BlockSpec((None, L, D), lambda b: (b, 0, 0)),
        ),
        compiler_params=pltpu.CompilerParams(
            dimension_semantics=("parallel",),                     # batch across TCs
        ),
        cost_estimate=pl.CostEstimate(flops=flops,
                                      transcendentals=transcendentals,
                                      bytes_accessed=bytes_accessed),
    )(src, mask, w_qkv, b_qkv, params["wo"], packed,
      params["w1"], params["b1"], params["w2"])
    return out


def reference_encoder_layer(src, mask, p, *, heads):
    """Pure-JAX mirror of the PyTorch forward (eval mode)."""
    B, L, D = src.shape
    dh = D // heads

    def ln(y):
        mu = jnp.mean(y, -1, keepdims=True)
        var = jnp.mean((y - mu) ** 2, -1, keepdims=True)
        return (y - mu) / jnp.sqrt(var + 1e-5) * p["ln_g"] + p["ln_b"]

    q = src @ p["wq"] + p["bq"]
    k = src @ p["wk"] + p["bk"]
    v = src @ p["wv"] + p["bv"]
    Q = q.reshape(B, L, heads, dh).transpose(0, 2, 1, 3)
    K = k.reshape(B, L, heads, dh).transpose(0, 2, 1, 3)
    V = v.reshape(B, L, heads, dh).transpose(0, 2, 1, 3)
    energy = jnp.einsum("bhqd,bhkd->bhqk", Q, K) / math.sqrt(dh)
    energy = jnp.where(mask == 0, -1e10, energy)          # same broadcast as torch
    attn = jax.nn.softmax(energy, axis=-1)
    x = jnp.einsum("bhqk,bhkd->bhqd", attn, V).transpose(0, 2, 1, 3).reshape(B, L, D)
    x = x @ p["wo"] + p["bo"]
    h1 = ln(src + x)
    ff = jnp.maximum(h1 @ p["w1"] + p["b1"], 0.0) @ p["w2"] + p["b2"]
    return ln(h1 + ff)


if __name__ == "__main__":
    # small shapes: batch == seq_len (required by the original mask broadcast), embed 32.
    B, L, D, H, PF = 8, 8, 32, 4, 64

    key = jax.random.PRNGKey(0)
    ks = jax.random.split(key, 16)

    def w(k, shape, fan_in):
        return jax.random.normal(k, shape, jnp.float32) / math.sqrt(fan_in)

    params = {
        "wq": w(ks[0], (D, D), D), "bq": w(ks[1], (1, D), D),
        "wk": w(ks[2], (D, D), D), "bk": w(ks[3], (1, D), D),
        "wv": w(ks[4], (D, D), D), "bv": w(ks[5], (1, D), D),
        "wo": w(ks[6], (D, D), D), "bo": w(ks[7], (1, D), D),
        "ln_g": jnp.ones((1, D), jnp.float32),
        "ln_b": jnp.zeros((1, D), jnp.float32),
        "w1": w(ks[8], (D, PF), D), "b1": w(ks[9], (1, PF), D),
        "w2": w(ks[10], (PF, D), PF), "b2": w(ks[11], (1, D), PF),
    }

    src = jax.random.normal(ks[12], (B, L, D), jnp.float32)
    # mask: 1 = attend, 0 = masked; mask out the last two key positions.
    mask = jnp.ones((B, L), jnp.int32).at[:, -2:].set(0)

    out = jax.block_until_ready(encoder_layer(src, mask, params, heads=H))
    ref = reference_encoder_layer(src, mask, params, heads=H)

    assert out.shape == (B, L, D)
    err = float(jnp.max(jnp.abs(out - ref)))
    assert err < 1e-3, f"mismatch vs pure-JAX reference: {err}"

    print("KERNEL_OK")
</pallas_src>

<mosaic_0001>
module attributes {stable_mosaic.version = 11 : i64} {
  func.func @encoder_layer_kernel(%arg0: i32, %arg1: memref<1x8x32xf32, #tpu.memory_space<vmem>>, %arg2: memref<8x8xi32, #tpu.memory_space<vmem>>, %arg3: memref<32x96xf32, #tpu.memory_space<vmem>>, %arg4: memref<1x96xf32, #tpu.memory_space<vmem>>, %arg5: memref<32x32xf32, #tpu.memory_space<vmem>>, %arg6: memref<4x32xf32, #tpu.memory_space<vmem>>, %arg7: memref<32x64xf32, #tpu.memory_space<vmem>>, %arg8: memref<1x64xf32, #tpu.memory_space<vmem>>, %arg9: memref<64x32xf32, #tpu.memory_space<vmem>>, %arg10: memref<1x8x32xf32, #tpu.memory_space<vmem>>) attributes {dimension_semantics = [#tpu.dimension_semantics<parallel>], iteration_bounds = array<i64: 8>, scalar_prefetch = 0 : i64, scratch_operands = 0 : i64, tpu.core_type = #tpu.core_type<tc>, window_params = [{transform_indices = @transform_0, window_bounds = array<i64: 1, 8, 32>}, {pipeline_mode = #tpu.pipeline_mode<synchronous>, transform_indices = @transform_1, window_bounds = array<i64: 8, 8>}, {pipeline_mode = #tpu.pipeline_mode<synchronous>, transform_indices = @transform_2, window_bounds = array<i64: 32, 96>}, {pipeline_mode = #tpu.pipeline_mode<synchronous>, transform_indices = @transform_3, window_bounds = array<i64: 1, 96>}, {pipeline_mode = #tpu.pipeline_mode<synchronous>, transform_indices = @transform_4, window_bounds = array<i64: 32, 32>}, {pipeline_mode = #tpu.pipeline_mode<synchronous>, transform_indices = @transform_5, window_bounds = array<i64: 4, 32>}, {pipeline_mode = #tpu.pipeline_mode<synchronous>, transform_indices = @transform_6, window_bounds = array<i64: 32, 64>}, {pipeline_mode = #tpu.pipeline_mode<synchronous>, transform_indices = @transform_7, window_bounds = array<i64: 1, 64>}, {pipeline_mode = #tpu.pipeline_mode<synchronous>, transform_indices = @transform_8, window_bounds = array<i64: 64, 32>}, {transform_indices = @transform_9, window_bounds = array<i64: 1, 8, 32>}]} {
    %c0 = arith.constant 0 : index
    %c0_0 = arith.constant 0 : index
    %c0_1 = arith.constant 0 : index
    %0 = vector.load %arg1[%c0, %c0_0, %c0_1] : memref<1x8x32xf32, #tpu.memory_space<vmem>>, vector<1x8x32xf32>
    %1 = vector.shape_cast %0 : vector<1x8x32xf32> to vector<8x32xf32>
    %c0_2 = arith.constant 0 : index
    %c0_3 = arith.constant 0 : index
    %2 = vector.load %arg3[%c0_2, %c0_3] : memref<32x96xf32, #tpu.memory_space<vmem>>, vector<32x96xf32>
    %cst = arith.constant dense<0.000000e+00> : vector<8x96xf32>
    %3 = tpu.matmul %1, %2, %cst {dimension_numbers = #tpu.dot_dimension_numbers<[1], [0], [0], [1], [0, 0, 1, 1], [], []>} : vector<8x32xf32>, vector<32x96xf32>, vector<8x96xf32> -> vector<8x96xf32>
    %c0_4 = arith.constant 0 : index
    %c0_5 = arith.constant 0 : index
    %4 = vector.load %arg4[%c0_4, %c0_5] : memref<1x96xf32, #tpu.memory_space<vmem>>, vector<1x96xf32>
    %5 = vector.broadcast %4 : vector<1x96xf32> to vector<8x96xf32>
    %6 = arith.addf %3, %5 : vector<8x96xf32>
    %c0_6 = arith.constant 0 : index
    %c0_7 = arith.constant 0 : index
    %7 = vector.load %arg2[%c0_6, %c0_7] : memref<8x8xi32, #tpu.memory_space<vmem>>, vector<8x8xi32>
    %c0_8 = arith.constant 0 : index
    %c0_9 = arith.constant 0 : index
    %8 = vector.load %arg6[%c0_8, %c0_9] : memref<4x32xf32, #tpu.memory_space<vmem>>, vector<4x32xf32>
    %9 = vector.extract_strided_slice %8 {offsets = [0, 0], sizes = [1, 32], strides = [1, 1]} : vector<4x32xf32> to vector<1x32xf32>
    %10 = vector.extract_strided_slice %8 {offsets = [1, 0], sizes = [1, 32], strides = [1, 1]} : vector<4x32xf32> to vector<1x32xf32>
    %11 = vector.extract_strided_slice %8 {offsets = [2, 0], sizes = [1, 32], strides = [1, 1]} : vector<4x32xf32> to vector<1x32xf32>
    %12 = vector.extract_strided_slice %8 {offsets = [3, 0], sizes = [1, 32], strides = [1, 1]} : vector<4x32xf32> to vector<1x32xf32>
    %13 = vector.extract_strided_slice %6 {offsets = [0, 0], sizes = [8, 8], strides = [1, 1]} : vector<8x96xf32> to vector<8x8xf32>
    %14 = vector.extract_strided_slice %6 {offsets = [0, 32], sizes = [8, 8], strides = [1, 1]} : vector<8x96xf32> to vector<8x8xf32>
    %15 = vector.extract_strided_slice %6 {offsets = [0, 64], sizes = [8, 8], strides = [1, 1]} : vector<8x96xf32> to vector<8x8xf32>
    "tpu.trace_start"() <{level = 10 : i32, message = "qd,kd->qk"}> : () -> ()
    %cst_10 = arith.constant dense<0.000000e+00> : vector<8x8xf32>
    %16 = tpu.matmul %13, %14, %cst_10 {dimension_numbers = #tpu.dot_dimension_numbers<[1], [1], [0], [0], [0, 0, 1, 0], [], []>} : vector<8x8xf32>, vector<8x8xf32>, vector<8x8xf32> -> vector<8x8xf32>
    %c0_i32 = arith.constant 0 : i32
    "tpu.trace_stop"() : () -> ()
    %17 = vector.broadcast %c0_i32 : i32 to vector<8x8xi32>
    %18 = arith.cmpi eq, %7, %17 : vector<8x8xi32>
    %cst_11 = arith.constant -1.000000e+10 : f32
    %19 = vector.broadcast %cst_11 : f32 to vector<8x8xf32>
    %20 = arith.select %18, %19, %16 : vector<8x8xi1>, vector<8x8xf32>
    %cst_12 = arith.constant dense<0xFF800000> : vector<8xf32>
    %21 = vector.multi_reduction <maximumf>, %20, %cst_12 [1] : vector<8x8xf32> to vector<8xf32>
    %22 = vector.shape_cast %21 : vector<8xf32> to vector<8x1xf32>
    %23 = vector.broadcast %22 : vector<8x1xf32> to vector<8x8xf32>
    %24 = arith.subf %20, %23 : vector<8x8xf32>
    %25 = math.exp %24 : vector<8x8xf32>
    %cst_13 = arith.constant dense<0.000000e+00> : vector<8xf32>
    %26 = vector.multi_reduction <add>, %25, %cst_13 [1] : vector<8x8xf32> to vector<8xf32>
    %27 = vector.shape_cast %26 : vector<8xf32> to vector<8x1xf32>
    %28 = vector.broadcast %27 : vector<8x1xf32> to vector<8x8xf32>
    %29 = arith.divf %25, %28 : vector<8x8xf32>
    %cst_14 = arith.constant dense<0.000000e+00> : vector<8x8xf32>
    %30 = tpu.matmul %29, %15, %cst_14 {dimension_numbers = #tpu.dot_dimension_numbers<[1], [0], [0], [1], [0, 0, 1, 1], [], []>} : vector<8x8xf32>, vector<8x8xf32>, vector<8x8xf32> -> vector<8x8xf32>
    %31 = vector.extract_strided_slice %6 {offsets = [0, 8], sizes = [8, 8], strides = [1, 1]} : vector<8x96xf32> to vector<8x8xf32>
    %32 = vector.extract_strided_slice %6 {offsets = [0, 40], sizes = [8, 8], strides = [1, 1]} : vector<8x96xf32> to vector<8x8xf32>
    %33 = vector.extract_strided_slice %6 {offsets = [0, 72], sizes = [8, 8], strides = [1, 1]} : vector<8x96xf32> to vector<8x8xf32>
    "tpu.trace_start"() <{level = 10 : i32, message = "qd,kd->qk"}> : () -> ()
    %cst_15 = arith.constant dense<0.000000e+00> : vector<8x8xf32>
    %34 = tpu.matmul %31, %32, %cst_15 {dimension_numbers = #tpu.dot_dimension_numbers<[1], [1], [0], [0], [0, 0, 1, 0], [], []>} : vector<8x8xf32>, vector<8x8xf32>, vector<8x8xf32> -> vector<8x8xf32>
    %c0_i32_16 = arith.constant 0 : i32
    "tpu.trace_stop"() : () -> ()
    %35 = vector.broadcast %c0_i32_16 : i32 to vector<8x8xi32>
    %36 = arith.cmpi eq, %7, %35 : vector<8x8xi32>
    %cst_17 = arith.constant -1.000000e+10 : f32
    %37 = vector.broadcast %cst_17 : f32 to vector<8x8xf32>
    %38 = arith.select %36, %37, %34 : vector<8x8xi1>, vector<8x8xf32>
    %cst_18 = arith.constant dense<0xFF800000> : vector<8xf32>
    %39 = vector.multi_reduction <maximumf>, %38, %cst_18 [1] : vector<8x8xf32> to vector<8xf32>
    %40 = vector.shape_cast %39 : vector<8xf32> to vector<8x1xf32>
    %41 = vector.broadcast %40 : vector<8x1xf32> to vector<8x8xf32>
    %42 = arith.subf %38, %41 : vector<8x8xf32>
    %43 = math.exp %42 : vector<8x8xf32>
    %cst_19 = arith.constant dense<0.000000e+00> : vector<8xf32>
    %44 = vector.multi_reduction <add>, %43, %cst_19 [1] : vector<8x8xf32> to vector<8xf32>
    %45 = vector.shape_cast %44 : vector<8xf32> to vector<8x1xf32>
    %46 = vector.broadcast %45 : vector<8x1xf32> to vector<8x8xf32>
    %47 = arith.divf %43, %46 : vector<8x8xf32>
    %cst_20 = arith.constant dense<0.000000e+00> : vector<8x8xf32>
    %48 = tpu.matmul %47, %33, %cst_20 {dimension_numbers = #tpu.dot_dimension_numbers<[1], [0], [0], [1], [0, 0, 1, 1], [], []>} : vector<8x8xf32>, vector<8x8xf32>, vector<8x8xf32> -> vector<8x8xf32>
    %49 = vector.extract_strided_slice %6 {offsets = [0, 16], sizes = [8, 8], strides = [1, 1]} : vector<8x96xf32> to vector<8x8xf32>
    %50 = vector.extract_strided_slice %6 {offsets = [0, 48], sizes = [8, 8], strides = [1, 1]} : vector<8x96xf32> to vector<8x8xf32>
    %51 = vector.extract_strided_slice %6 {offsets = [0, 80], sizes = [8, 8], strides = [1, 1]} : vector<8x96xf32> to vector<8x8xf32>
    "tpu.trace_start"() <{level = 10 : i32, message = "qd,kd->qk"}> : () -> ()
    %cst_21 = arith.constant dense<0.000000e+00> : vector<8x8xf32>
    %52 = tpu.matmul %49, %50, %cst_21 {dimension_numbers = #tpu.dot_dimension_numbers<[1], [1], [0], [0], [0, 0, 1, 0], [], []>} : vector<8x8xf32>, vector<8x8xf32>, vector<8x8xf32> -> vector<8x8xf32>
    %c0_i32_22 = arith.constant 0 : i32
    "tpu.trace_stop"() : () -> ()
    %53 = vector.broadcast %c0_i32_22 : i32 to vector<8x8xi32>
    %54 = arith.cmpi eq, %7, %53 : vector<8x8xi32>
    %cst_23 = arith.constant -1.000000e+10 : f32
    %55 = vector.broadcast %cst_23 : f32 to vector<8x8xf32>
    %56 = arith.select %54, %55, %52 : vector<8x8xi1>, vector<8x8xf32>
    %cst_24 = arith.constant dense<0xFF800000> : vector<8xf32>
    %57 = vector.multi_reduction <maximumf>, %56, %cst_24 [1] : vector<8x8xf32> to vector<8xf32>
    %58 = vector.shape_cast %57 : vector<8xf32> to vector<8x1xf32>
    %59 = vector.broadcast %58 : vector<8x1xf32> to vector<8x8xf32>
    %60 = arith.subf %56, %59 : vector<8x8xf32>
    %61 = math.exp %60 : vector<8x8xf32>
    %cst_25 = arith.constant dense<0.000000e+00> : vector<8xf32>
    %62 = vector.multi_reduction <add>, %61, %cst_25 [1] : vector<8x8xf32> to vector<8xf32>
    %63 = vector.shape_cast %62 : vector<8xf32> to vector<8x1xf32>
    %64 = vector.broadcast %63 : vector<8x1xf32> to vector<8x8xf32>
    %65 = arith.divf %61, %64 : vector<8x8xf32>
    %cst_26 = arith.constant dense<0.000000e+00> : vector<8x8xf32>
    %66 = tpu.matmul %65, %51, %cst_26 {dimension_numbers = #tpu.dot_dimension_numbers<[1], [0], [0], [1], [0, 0, 1, 1], [], []>} : vector<8x8xf32>, vector<8x8xf32>, vector<8x8xf32> -> vector<8x8xf32>
    %67 = vector.extract_strided_slice %6 {offsets = [0, 24], sizes = [8, 8], strides = [1, 1]} : vector<8x96xf32> to vector<8x8xf32>
    %68 = vector.extract_strided_slice %6 {offsets = [0, 56], sizes = [8, 8], strides = [1, 1]} : vector<8x96xf32> to vector<8x8xf32>
    %69 = vector.extract_strided_slice %6 {offsets = [0, 88], sizes = [8, 8], strides = [1, 1]} : vector<8x96xf32> to vector<8x8xf32>
    "tpu.trace_start"() <{level = 10 : i32, message = "qd,kd->qk"}> : () -> ()
    %cst_27 = arith.constant dense<0.000000e+00> : vector<8x8xf32>
    %70 = tpu.matmul %67, %68, %cst_27 {dimension_numbers = #tpu.dot_dimension_numbers<[1], [1], [0], [0], [0, 0, 1, 0], [], []>} : vector<8x8xf32>, vector<8x8xf32>, vector<8x8xf32> -> vector<8x8xf32>
    %c0_i32_28 = arith.constant 0 : i32
    "tpu.trace_stop"() : () -> ()
    %71 = vector.broadcast %c0_i32_28 : i32 to vector<8x8xi32>
    %72 = arith.cmpi eq, %7, %71 : vector<8x8xi32>
    %cst_29 = arith.constant -1.000000e+10 : f32
    %73 = vector.broadcast %cst_29 : f32 to vector<8x8xf32>
    %74 = arith.select %72, %73, %70 : vector<8x8xi1>, vector<8x8xf32>
    %cst_30 = arith.constant dense<0xFF800000> : vector<8xf32>
    %75 = vector.multi_reduction <maximumf>, %74, %cst_30 [1] : vector<8x8xf32> to vector<8xf32>
    %76 = vector.shape_cast %75 : vector<8xf32> to vector<8x1xf32>
    %77 = vector.broadcast %76 : vector<8x1xf32> to vector<8x8xf32>
    %78 = arith.subf %74, %77 : vector<8x8xf32>
    %79 = math.exp %78 : vector<8x8xf32>
    %cst_31 = arith.constant dense<0.000000e+00> : vector<8xf32>
    %80 = vector.multi_reduction <add>, %79, %cst_31 [1] : vector<8x8xf32> to vector<8xf32>
    %81 = vector.shape_cast %80 : vector<8xf32> to vector<8x1xf32>
    %82 = vector.broadcast %81 : vector<8x1xf32> to vector<8x8xf32>
    %83 = arith.divf %79, %82 : vector<8x8xf32>
    %cst_32 = arith.constant dense<0.000000e+00> : vector<8x8xf32>
    %84 = tpu.matmul %83, %69, %cst_32 {dimension_numbers = #tpu.dot_dimension_numbers<[1], [0], [0], [1], [0, 0, 1, 1], [], []>} : vector<8x8xf32>, vector<8x8xf32>, vector<8x8xf32> -> vector<8x8xf32>
    %85 = tpu.concatenate %30, %48, %66, %84 in 1 : vector<8x8xf32>, vector<8x8xf32>, vector<8x8xf32>, vector<8x8xf32> -> vector<8x32xf32>
    %c0_33 = arith.constant 0 : index
    %c0_34 = arith.constant 0 : index
    %86 = vector.load %arg5[%c0_33, %c0_34] : memref<32x32xf32, #tpu.memory_space<vmem>>, vector<32x32xf32>
    %cst_35 = arith.constant dense<0.000000e+00> : vector<8x32xf32>
    %87 = tpu.matmul %85, %86, %cst_35 {dimension_numbers = #tpu.dot_dimension_numbers<[1], [0], [0], [1], [0, 0, 1, 1], [], []>} : vector<8x32xf32>, vector<32x32xf32>, vector<8x32xf32> -> vector<8x32xf32>
    %88 = vector.broadcast %9 : vector<1x32xf32> to vector<8x32xf32>
    %89 = arith.addf %87, %88 : vector<8x32xf32>
    %90 = arith.addf %1, %89 : vector<8x32xf32>
    %cst_36 = arith.constant dense<0.000000e+00> : vector<8xf32>
    %91 = vector.multi_reduction <add>, %90, %cst_36 [1] : vector<8x32xf32> to vector<8xf32>
    %92 = vector.shape_cast %91 : vector<8xf32> to vector<8x1xf32>
    %cst_37 = arith.constant 3.200000e+01 : f32
    %93 = vector.broadcast %cst_37 : f32 to vector<8x1xf32>
    %94 = arith.divf %92, %93 : vector<8x1xf32>
    %95 = vector.broadcast %94 : vector<8x1xf32> to vector<8x32xf32>
    %96 = arith.subf %90, %95 : vector<8x32xf32>
    %97 = arith.mulf %96, %96 : vector<8x32xf32>
    %cst_38 = arith.constant dense<0.000000e+00> : vector<8xf32>
    %98 = vector.multi_reduction <add>, %97, %cst_38 [1] : vector<8x32xf32> to vector<8xf32>
    %99 = vector.shape_cast %98 : vector<8xf32> to vector<8x1xf32>
    %cst_39 = arith.constant 3.200000e+01 : f32
    %100 = vector.broadcast %cst_39 : f32 to vector<8x1xf32>
    %101 = arith.divf %99, %100 : vector<8x1xf32>
    %102 = vector.broadcast %94 : vector<8x1xf32> to vector<8x32xf32>
    %103 = arith.subf %90, %102 : vector<8x32xf32>
    %cst_40 = arith.constant 9.99999974E-6 : f32
    %104 = vector.broadcast %cst_40 : f32 to vector<8x1xf32>
    %105 = arith.addf %101, %104 : vector<8x1xf32>
    %106 = math.rsqrt %105 : vector<8x1xf32>
    %107 = vector.broadcast %106 : vector<8x1xf32> to vector<8x32xf32>
    %108 = arith.mulf %103, %107 : vector<8x32xf32>
    %109 = vector.broadcast %10 : vector<1x32xf32> to vector<8x32xf32>
    %110 = arith.mulf %108, %109 : vector<8x32xf32>
    %111 = vector.broadcast %11 : vector<1x32xf32> to vector<8x32xf32>
    %112 = arith.addf %110, %111 : vector<8x32xf32>
    %c0_41 = arith.constant 0 : index
    %c0_42 = arith.constant 0 : index
    %113 = vector.load %arg7[%c0_41, %c0_42] : memref<32x64xf32, #tpu.memory_space<vmem>>, vector<32x64xf32>
    %cst_43 = arith.constant dense<0.000000e+00> : vector<8x64xf32>
    %114 = tpu.matmul %112, %113, %cst_43 {dimension_numbers = #tpu.dot_dimension_numbers<[1], [0], [0], [1], [0, 0, 1, 1], [], []>} : vector<8x32xf32>, vector<32x64xf32>, vector<8x64xf32> -> vector<8x64xf32>
    %c0_44 = arith.constant 0 : index
    %c0_45 = arith.constant 0 : index
    %115 = vector.load %arg8[%c0_44, %c0_45] : memref<1x64xf32, #tpu.memory_space<vmem>>, vector<1x64xf32>
    %116 = vector.broadcast %115 : vector<1x64xf32> to vector<8x64xf32>
    %117 = arith.addf %114, %116 : vector<8x64xf32>
    %cst_46 = arith.constant 0.000000e+00 : f32
    %118 = vector.broadcast %cst_46 : f32 to vector<8x64xf32>
    %119 = arith.maximumf %117, %118 : vector<8x64xf32>
    %c0_47 = arith.constant 0 : index
    %c0_48 = arith.constant 0 : index
    %120 = vector.load %arg9[%c0_47, %c0_48] : memref<64x32xf32, #tpu.memory_space<vmem>>, vector<64x32xf32>
    %cst_49 = arith.constant dense<0.000000e+00> : vector<8x32xf32>
    %121 = tpu.matmul %119, %120, %cst_49 {dimension_numbers = #tpu.dot_dimension_numbers<[1], [0], [0], [1], [0, 0, 1, 1], [], []>} : vector<8x64xf32>, vector<64x32xf32>, vector<8x32xf32> -> vector<8x32xf32>
    %122 = vector.broadcast %12 : vector<1x32xf32> to vector<8x32xf32>
    %123 = arith.addf %121, %122 : vector<8x32xf32>
    %124 = arith.addf %112, %123 : vector<8x32xf32>
    %cst_50 = arith.constant dense<0.000000e+00> : vector<8xf32>
    %125 = vector.multi_reduction <add>, %124, %cst_50 [1] : vector<8x32xf32> to vector<8xf32>
    %126 = vector.shape_cast %125 : vector<8xf32> to vector<8x1xf32>
    %cst_51 = arith.constant 3.200000e+01 : f32
    %127 = vector.broadcast %cst_51 : f32 to vector<8x1xf32>
    %128 = arith.divf %126, %127 : vector<8x1xf32>
    %129 = vector.broadcast %128 : vector<8x1xf32> to vector<8x32xf32>
    %130 = arith.subf %124, %129 : vector<8x32xf32>
    %131 = arith.mulf %130, %130 : vector<8x32xf32>
    %cst_52 = arith.constant dense<0.000000e+00> : vector<8xf32>
    %132 = vector.multi_reduction <add>, %131, %cst_52 [1] : vector<8x32xf32> to vector<8xf32>
    %133 = vector.shape_cast %132 : vector<8xf32> to vector<8x1xf32>
    %cst_53 = arith.constant 3.200000e+01 : f32
    %134 = vector.broadcast %cst_53 : f32 to vector<8x1xf32>
    %135 = arith.divf %133, %134 : vector<8x1xf32>
    %136 = vector.broadcast %128 : vector<8x1xf32> to vector<8x32xf32>
    %137 = arith.subf %124, %136 : vector<8x32xf32>
    %cst_54 = arith.constant 9.99999974E-6 : f32
    %138 = vector.broadcast %cst_54 : f32 to vector<8x1xf32>
    %139 = arith.addf %135, %138 : vector<8x1xf32>
    %140 = math.rsqrt %139 : vector<8x1xf32>
    %141 = vector.broadcast %140 : vector<8x1xf32> to vector<8x32xf32>
    %142 = arith.mulf %137, %141 : vector<8x32xf32>
    %143 = vector.broadcast %10 : vector<1x32xf32> to vector<8x32xf32>
    %144 = arith.mulf %142, %143 : vector<8x32xf32>
    %145 = vector.broadcast %11 : vector<1x32xf32> to vector<8x32xf32>
    %146 = arith.addf %144, %145 : vector<8x32xf32>
    %c0_55 = arith.constant 0 : index
    %c0_56 = arith.constant 0 : index
    %c0_57 = arith.constant 0 : index
    %147 = vector.load %arg10[%c0_55, %c0_56, %c0_57] : memref<1x8x32xf32, #tpu.memory_space<vmem>>, vector<1x8x32xf32>
    %148 = vector.shape_cast %147 : vector<1x8x32xf32> to vector<8x32xf32>
    %149 = vector.shape_cast %146 : vector<8x32xf32> to vector<1x8x32xf32>
    tpu.vector_store %arg10[%c0_55, %c0_56, %c0_57], %149 {strides = array<i32>} : memref<1x8x32xf32, #tpu.memory_space<vmem>>, vector<1x8x32xf32>,
    return
  }
  func.func @transform_0(%arg0: i32) -> (i32, i32, i32) {
    %c0_i32 = arith.constant 0 : i32
    %c0_i32_0 = arith.constant 0 : i32
    %c0_i32_1 = arith.constant 0 : i32
    return %arg0, %c0_i32, %c0_i32_0 : i32, i32, i32
  }
  func.func @transform_1(%arg0: i32) -> (i32, i32) {
    %c0_i32 = arith.constant 0 : i32
    %c0_i32_0 = arith.constant 0 : i32
    %c0_i32_1 = arith.constant 0 : i32
    return %c0_i32, %c0_i32_0 : i32, i32
  }
  func.func @transform_2(%arg0: i32) -> (i32, i32) {
    %c0_i32 = arith.constant 0 : i32
    %c0_i32_0 = arith.constant 0 : i32
    %c0_i32_1 = arith.constant 0 : i32
    return %c0_i32, %c0_i32_0 : i32, i32
  }
  func.func @transform_3(%arg0: i32) -> (i32, i32) {
    %c0_i32 = arith.constant 0 : i32
    %c0_i32_0 = arith.constant 0 : i32
    %c0_i32_1 = arith.constant 0 : i32
    return %c0_i32, %c0_i32_0 : i32, i32
  }
  func.func @transform_4(%arg0: i32) -> (i32, i32) {
    %c0_i32 = arith.constant 0 : i32
    %c0_i32_0 = arith.constant 0 : i32
    %c0_i32_1 = arith.constant 0 : i32
    return %c0_i32, %c0_i32_0 : i32, i32
  }
  func.func @transform_5(%arg0: i32) -> (i32, i32) {
    %c0_i32 = arith.constant 0 : i32
    %c0_i32_0 = arith.constant 0 : i32
    %c0_i32_1 = arith.constant 0 : i32
    return %c0_i32, %c0_i32_0 : i32, i32
  }
  func.func @transform_6(%arg0: i32) -> (i32, i32) {
    %c0_i32 = arith.constant 0 : i32
    %c0_i32_0 = arith.constant 0 : i32
    %c0_i32_1 = arith.constant 0 : i32
    return %c0_i32, %c0_i32_0 : i32, i32
  }
  func.func @transform_7(%arg0: i32) -> (i32, i32) {
    %c0_i32 = arith.constant 0 : i32
    %c0_i32_0 = arith.constant 0 : i32
    %c0_i32_1 = arith.constant 0 : i32
    return %c0_i32, %c0_i32_0 : i32, i32
  }
  func.func @transform_8(%arg0: i32) -> (i32, i32) {
    %c0_i32 = arith.constant 0 : i32
    %c0_i32_0 = arith.constant 0 : i32
    %c0_i32_1 = arith.constant 0 : i32
    return %c0_i32, %c0_i32_0 : i32, i32
  }
  func.func @transform_9(%arg0: i32) -> (i32, i32, i32) {
    %c0_i32 = arith.constant 0 : i32
    %c0_i32_0 = arith.constant 0 : i32
    %c0_i32_1 = arith.constant 0 : i32
    return %arg0, %c0_i32, %c0_i32_0 : i32, i32, i32
  }
}

</mosaic_0001>

<llo_original>
// kernel: encoder_layer.1
$region0: #{encoder_layer.1}
  #allocation0 [shape = 'u32[]', space=smem, size = 0x4, offset = 0x4, fixed_abs, tag = 'smem constant byte address 0x4 - core index']
  #allocation1 [shape = 'u32[144,128]{1,0:T(1,128)}', space=vmem, size = 0x12000, scoped, tag = 'internal scratch']
  %s0 = inlined_call_operand.vmem [shape: f32[8,8,32], index: 0, kind: input, shape index: {}]
  %s1 = inlined_call_operand.vmem [shape: s32[8,8], index: 1, kind: input, shape index: {}]
  %s2 = inlined_call_operand.vmem [shape: f32[32,96], index: 2, kind: input, shape index: {}]
  %s3 = inlined_call_operand.vmem [shape: f32[1,96], index: 3, kind: input, shape index: {}]
  %s4 = inlined_call_operand.vmem [shape: f32[32,32], index: 4, kind: input, shape index: {}]
  %s5 = inlined_call_operand.vmem [shape: f32[4,32], index: 5, kind: input, shape index: {}]
  %s6 = inlined_call_operand.vmem [shape: f32[32,64], index: 6, kind: input, shape index: {}]
  %s7 = inlined_call_operand.vmem [shape: f32[1,64], index: 7, kind: input, shape index: {}]
  %s8 = inlined_call_operand.vmem [shape: f32[64,32], index: 8, kind: input, shape index: {}]
  %s9 = inlined_call_operand.hbm [shape: f32[8,8,32], index: 9, kind: output, shape index: {}]
  %s10 = sld [smem:[#allocation0]]
  $region69: #{encoder_layer.1} parent=0
    _
  %s12 = ssub.s32 1, %s10
  %s13 = scalar_select 0, %s12, %s10
  $region1: #{encoder_layer.1} parent=0
    #allocation2 [shape = 'u8[8192]{0}', space=vmem, size = 0x2000, scoped, tag = 'output window, operand 0']
    #allocation3 [shape = 's32[2]{0}', space=sflag, size = 0x8, scoped, tag = 'scoped memory for encoder_layer.1']
    %14 = vsyncpa [#allocation3], 0
    %s15 = scalar_lea.sflag [#allocation3], 1
    %16 = vsyncpa %s15, 0
    loop: start=0, step=1, limit=10
    $region2: #{encoder_layer.1} parent=1 // loop_pre_header
      _
    $region3: #{encoder_layer.1} parent=1 // loop_header
      %s18 = sphi 0, %s22
      %p19 = scmp.ge.s32.totalorder %s18, 10
      %s28 = sphi 0, %s30
      %s31 = sphi 0, %s28
      %s32 = sphi 0, %s31
      %s48 = sphi 0, %s32
      %s52 = sphi 0, %s52
      %s54 = sphi 0, %s52
      %s55 = sphi 0, %s54
      %s69 = sphi 0, %s55
      %s73 = sphi 0, %s73
      %s75 = sphi 0, %s73
      %s76 = sphi 0, %s75
      %s90 = sphi 0, %s76
      %s94 = sphi 0, %s94
      %s96 = sphi 0, %s94
      %s97 = sphi 0, %s96
      %s111 = sphi 0, %s97
      %s115 = sphi 0, %s115
      %s117 = sphi 0, %s115
      %s118 = sphi 0, %s117
      %s132 = sphi 0, %s118
      %s136 = sphi 0, %s136
      %s138 = sphi 0, %s136
      %s139 = sphi 0, %s138
      %s153 = sphi 0, %s139
      %s157 = sphi 0, %s157
      %s159 = sphi 0, %s157
      %s160 = sphi 0, %s159
      %s174 = sphi 0, %s160
      %s178 = sphi 0, %s178
      %s180 = sphi 0, %s178
      %s181 = sphi 0, %s180
      %s195 = sphi 0, %s181
      %s199 = sphi 0, %s199
      %s201 = sphi 0, %s199
      %s202 = sphi 0, %s201
      %s216 = sphi 0, %s202
      %s222 = sphi 0, %s224
      %s225 = sphi 0, %s222
      %s226 = sphi 0, %s225
      %s242 = sphi 0, %s226
    $region4: #{encoder_layer.1} parent=1 // loop_header_branch
      %21 = sbr.rel (%p19) target = $region8
    $region5: #{encoder_layer.1} parent=1 // loop_body
      %s23 = ssub.s32 %s18, 1
      %s24 = ssub.s32 %s18, 2
      %s25 = sadd.s32 %s18, 1
      %s26 = ssub.s32 %s18, %s25
      %p27 = scmp.eq.s32.totalorder %s26, 0
      %s29 = sadd.s32 %s28, 1
      %s30 = scalar_select %p27, %s28, %s29
      %p33 = pneg %p27
      %p34 = scmp.eq.s32.totalorder %s18, 7
      %p35 = por %p33, %p34
      %p36 = scmp.ne.s32.totalorder %s28, %s31
      %p37 = scmp.eq.s32.totalorder %s18, 0
      %p38 = por %p36, %p37
      %p39 = scmp.ne.s32.totalorder %s28, %s31
      %p40 = scmp.eq.s32.totalorder %s23, 7
      %p41 = por %p39, %p40
      %p42 = scmp.ne.s32.totalorder %s31, %s32
      %p43 = scmp.eq.s32.totalorder %s23, 0
      %p44 = por %p42, %p43
      %p45 = scmp.ne.s32.totalorder %s31, %s32
      %p46 = scmp.eq.s32.totalorder %s24, 7
      %p47 = por %p45, %p46
      %p49 = scmp.ne.s32.totalorder %s32, %s48
      %p50 = scmp.eq.s32.totalorder %s24, 0
      %p51 = por %p49, %p50
      %s53 = sadd.s32 %s52, 1
      %p56 = scmp.eq.s32.totalorder %s18, 7
      %p57 = scmp.ne.s32.totalorder %s52, %s54
      %p58 = scmp.eq.s32.totalorder %s18, 0
      %p59 = por %p57, %p58
      %p60 = scmp.ne.s32.totalorder %s52, %s54
      %p61 = scmp.eq.s32.totalorder %s23, 7
      %p62 = por %p60, %p61
      %p63 = scmp.ne.s32.totalorder %s54, %s55
      %p64 = scmp.eq.s32.totalorder %s23, 0
      %p65 = por %p63, %p64
      %p66 = scmp.ne.s32.totalorder %s54, %s55
      %p67 = scmp.eq.s32.totalorder %s24, 7
      %p68 = por %p66, %p67
      %p70 = scmp.ne.s32.totalorder %s55, %s69
      %p71 = scmp.eq.s32.totalorder %s24, 0
      %p72 = por %p70, %p71
      %s74 = sadd.s32 %s73, 1
      %p77 = scmp.eq.s32.totalorder %s18, 7
      %p78 = scmp.ne.s32.totalorder %s73, %s75
      %p79 = scmp.eq.s32.totalorder %s18, 0
      %p80 = por %p78, %p79
      %p81 = scmp.ne.s32.totalorder %s73, %s75
      %p82 = scmp.eq.s32.totalorder %s23, 7
      %p83 = por %p81, %p82
      %p84 = scmp.ne.s32.totalorder %s75, %s76
      %p85 = scmp.eq.s32.totalorder %s23, 0
      %p86 = por %p84, %p85
      %p87 = scmp.ne.s32.totalorder %s75, %s76
      %p88 = scmp.eq.s32.totalorder %s24, 7
      %p89 = por %p87, %p88
      %p91 = scmp.ne.s32.totalorder %s76, %s90
      %p92 = scmp.eq.s32.totalorder %s24, 0
      %p93 = por %p91, %p92
      %s95 = sadd.s32 %s94, 1
      %p98 = scmp.eq.s32.totalorder %s18, 7
      %p99 = scmp.ne.s32.totalorder %s94, %s96
      %p100 = scmp.eq.s32.totalorder %s18, 0
      %p101 = por %p99, %p100
      %p102 = scmp.ne.s32.totalorder %s94, %s96
      %p103 = scmp.eq.s32.totalorder %s23, 7
      %p104 = por %p102, %p103
      %p105 = scmp.ne.s32.totalorder %s96, %s97
      %p106 = scmp.eq.s32.totalorder %s23, 0
      %p107 = por %p105, %p106
      %p108 = scmp.ne.s32.totalorder %s96, %s97
      %p109 = scmp.eq.s32.totalorder %s24, 7
      %p110 = por %p108, %p109
      %p112 = scmp.ne.s32.totalorder %s97, %s111
      %p113 = scmp.eq.s32.totalorder %s24, 0
      %p114 = por %p112, %p113
      %s116 = sadd.s32 %s115, 1
      %p119 = scmp.eq.s32.totalorder %s18, 7
      %p120 = scmp.ne.s32.totalorder %s115, %s117
      %p121 = scmp.eq.s32.totalorder %s18, 0
      %p122 = por %p120, %p121
      %p123 = scmp.ne.s32.totalorder %s115, %s117
      %p124 = scmp.eq.s32.totalorder %s23, 7
      %p125 = por %p123, %p124
      %p126 = scmp.ne.s32.totalorder %s117, %s118
      %p127 = scmp.eq.s32.totalorder %s23, 0
      %p128 = por %p126, %p127
      %p129 = scmp.ne.s32.totalorder %s117, %s118
      %p130 = scmp.eq.s32.totalorder %s24, 7
      %p131 = por %p129, %p130
      %p133 = scmp.ne.s32.totalorder %s118, %s132
      %p134 = scmp.eq.s32.totalorder %s24, 0
      %p135 = por %p133, %p134
      %s137 = sadd.s32 %s136, 1
      %p140 = scmp.eq.s32.totalorder %s18, 7
      %p141 = scmp.ne.s32.totalorder %s136, %s138
      %p142 = scmp.eq.s32.totalorder %s18, 0
      %p143 = por %p141, %p142
      %p144 = scmp.ne.s32.totalorder %s136, %s138
      %p145 = scmp.eq.s32.totalorder %s23, 7
      %p146 = por %p144, %p145
      %p147 = scmp.ne.s32.totalorder %s138, %s139
      %p148 = scmp.eq.s32.totalorder %s23, 0
      %p149 = por %p147, %p148
      %p150 = scmp.ne.s32.totalorder %s138, %s139
      %p151 = scmp.eq.s32.totalorder %s24, 7
      %p152 = por %p150, %p151
      %p154 = scmp.ne.s32.totalorder %s139, %s153
      %p155 = scmp.eq.s32.totalorder %s24, 0
      %p156 = por %p154, %p155
      %s158 = sadd.s32 %s157, 1
      %p161 = scmp.eq.s32.totalorder %s18, 7
      %p162 = scmp.ne.s32.totalorder %s157, %s159
      %p163 = scmp.eq.s32.totalorder %s18, 0
      %p164 = por %p162, %p163
      %p165 = scmp.ne.s32.totalorder %s157, %s159
      %p166 = scmp.eq.s32.totalorder %s23, 7
      %p167 = por %p165, %p166
      %p168 = scmp.ne.s32.totalorder %s159, %s160
      %p169 = scmp.eq.s32.totalorder %s23, 0
      %p170 = por %p168, %p169
      %p171 = scmp.ne.s32.totalorder %s159, %s160
      %p172 = scmp.eq.s32.totalorder %s24, 7
      %p173 = por %p171, %p172
      %p175 = scmp.ne.s32.totalorder %s160, %s174
      %p176 = scmp.eq.s32.totalorder %s24, 0
      %p177 = por %p175, %p176
      %s179 = sadd.s32 %s178, 1
      %p182 = scmp.eq.s32.totalorder %s18, 7
      %p183 = scmp.ne.s32.totalorder %s178, %s180
      %p184 = scmp.eq.s32.totalorder %s18, 0
      %p185 = por %p183, %p184
      %p186 = scmp.ne.s32.totalorder %s178, %s180
      %p187 = scmp.eq.s32.totalorder %s23, 7
      %p188 = por %p186, %p187
      %p189 = scmp.ne.s32.totalorder %s180, %s181
      %p190 = scmp.eq.s32.totalorder %s23, 0
      %p191 = por %p189, %p190
      %p192 = scmp.ne.s32.totalorder %s180, %s181
      %p193 = scmp.eq.s32.totalorder %s24, 7
      %p194 = por %p192, %p193
      %p196 = scmp.ne.s32.totalorder %s181, %s195
      %p197 = scmp.eq.s32.totalorder %s24, 0
      %p198 = por %p196, %p197
      %s200 = sadd.s32 %s199, 1
      %p203 = scmp.eq.s32.totalorder %s18, 7
      %p204 = scmp.ne.s32.totalorder %s199, %s201
      %p205 = scmp.eq.s32.totalorder %s18, 0
      %p206 = por %p204, %p205
      %p207 = scmp.ne.s32.totalorder %s199, %s201
      %p208 = scmp.eq.s32.totalorder %s23, 7
      %p209 = por %p207, %p208
      %p210 = scmp.ne.s32.totalorder %s201, %s202
      %p211 = scmp.eq.s32.totalorder %s23, 0
      %p212 = por %p210, %p211
      %p213 = scmp.ne.s32.totalorder %s201, %s202
      %p214 = scmp.eq.s32.totalorder %s24, 7
      %p215 = por %p213, %p214
      %p217 = scmp.ne.s32.totalorder %s202, %s216
      %p218 = scmp.eq.s32.totalorder %s24, 0
      %p219 = por %p217, %p218
      %s220 = ssub.s32 %s18, %s25
      %p221 = scmp.eq.s32.totalorder %s220, 0
      %s223 = sadd.s32 %s222, 1
      %s224 = scalar_select %p221, %s222, %s223
      %p227 = pneg %p221
      %p228 = scmp.eq.s32.totalorder %s18, 7
      %p229 = por %p227, %p228
      %p230 = scmp.ne.s32.totalorder %s222, %s225
      %p231 = scmp.eq.s32.totalorder %s18, 0
      %p232 = por %p230, %p231
      %p233 = scmp.ne.s32.totalorder %s222, %s225
      %p234 = scmp.eq.s32.totalorder %s23, 7
      %p235 = por %p233, %p234
      %p236 = scmp.ne.s32.totalorder %s225, %s226
      %p237 = scmp.eq.s32.totalorder %s23, 0
      %p238 = por %p236, %p237
      %p239 = scmp.ne.s32.totalorder %s225, %s226
      %p240 = scmp.eq.s32.totalorder %s24, 7
      %p241 = por %p239, %p240
      %p243 = scmp.ne.s32.totalorder %s226, %s242
      %p244 = scmp.eq.s32.totalorder %s24, 0
      %p245 = por %p243, %p244
      %p246 = scmp.le.s32.totalorder 1, %s18
      %p247 = scmp.lt.s32.totalorder %s18, 9
      %p248 = pnand %p246, %p247
      %p249 = pneg %p248
      // Predicated region
      $region9: #{encoder_layer.1} parent=5 // pred_check
        _
      $region10: #{encoder_layer.1} parent=5 // pred_check_branch
        %251 = sbr.rel (%p248) target = $region12
      $region11: #{encoder_layer.1} parent=5 // pred_region
        %s252 = ssub.s32 %s18, 1
        // Predicated region
        $region13: #{encoder_layer.1} parent=11 // pred_check
          %p253 = pneg %p65
        $region14: #{encoder_layer.1} parent=11 // pred_check_branch
          %255 = sbr.rel (%p253) target = $region16
        $region15: #{encoder_layer.1} parent=11 // pred_region
          _
        $region16: #{encoder_layer.1} parent=11 // pred_fallthru
          _
        // Predicated region
        $region17: #{encoder_layer.1} parent=11 // pred_check
          %p256 = pneg %p86
        $region18: #{encoder_layer.1} parent=11 // pred_check_branch
          %258 = sbr.rel (%p256) target = $region20
        $region19: #{encoder_layer.1} parent=11 // pred_region
          _
        $region20: #{encoder_layer.1} parent=11 // pred_fallthru
          _
        // Predicated region
        $region21: #{encoder_layer.1} parent=11 // pred_check
          %p259 = pneg %p107
        $region22: #{encoder_layer.1} parent=11 // pred_check_branch
          %261 = sbr.rel (%p259) target = $region24
        $region23: #{encoder_layer.1} parent=11 // pred_region
          _
        $region24: #{encoder_layer.1} parent=11 // pred_fallthru
          _
        // Predicated region
        $region25: #{encoder_layer.1} parent=11 // pred_check
          %p262 = pneg %p128
        $region26: #{encoder_layer.1} parent=11 // pred_check_branch
          %264 = sbr.rel (%p262) target = $region28
        $region27: #{encoder_layer.1} parent=11 // pred_region
          _
        $region28: #{encoder_layer.1} parent=11 // pred_fallthru
          _
        // Predicated region
        $region29: #{encoder_layer.1} parent=11 // pred_check
          %p265 = pneg %p149
        $region30: #{encoder_layer.1} parent=11 // pred_check_branch
          %267 = sbr.rel (%p265) target = $region32
        $region31: #{encoder_layer.1} parent=11 // pred_region
          _
        $region32: #{encoder_layer.1} parent=11 // pred_fallthru
          _
        // Predicated region
        $region33: #{encoder_layer.1} parent=11 // pred_check
          %p268 = pneg %p170
        $region34: #{encoder_layer.1} parent=11 // pred_check_branch
          %270 = sbr.rel (%p268) target = $region36
        $region35: #{encoder_layer.1} parent=11 // pred_region
          _
        $region36: #{encoder_layer.1} parent=11 // pred_fallthru
          _
        // Predicated region
        $region37: #{encoder_layer.1} parent=11 // pred_check
          %p271 = pneg %p191
        $region38: #{encoder_layer.1} parent=11 // pred_check_branch
          %273 = sbr.rel (%p271) target = $region40
        $region39: #{encoder_layer.1} parent=11 // pred_region
          _
        $region40: #{encoder_layer.1} parent=11 // pred_fallthru
          _
        // Predicated region
        $region41: #{encoder_layer.1} parent=11 // pred_check
          %p274 = pneg %p212
        $region42: #{encoder_layer.1} parent=11 // pred_check_branch
          %276 = sbr.rel (%p274) target = $region44
        $region43: #{encoder_layer.1} parent=11 // pred_region
          _
        $region44: #{encoder_layer.1} parent=11 // pred_fallthru
          _
      $region12: #{encoder_layer.1} parent=5 // pred_fallthru
        _
      %p277 = scmp.lt.s32.totalorder %s18, 8
      // Predicated region
      $region45: #{encoder_layer.1} parent=5 // pred_check
        %p278 = pneg %p277
      $region46: #{encoder_layer.1} parent=5 // pred_check_branch
        %280 = sbr.rel (%p278) target = $region48
      $region47: #{encoder_layer.1} parent=5 // pred_region
        // Predicated region
        $region49: #{encoder_layer.1} parent=47 // pred_check
          %p281 = pneg %p38
        $region50: #{encoder_layer.1} parent=47 // pred_check_branch
          %283 = sbr.rel (%p281) target = $region52
        $region51: #{encoder_layer.1} parent=47 // pred_region
          %p284 = scmp.lt.s32.totalorder %s18, 7
          %s285 = scalar_select %p284, %s18, 7
          %s286 = smul.addr %s285, 8
          %s287 = scalar_lea.vmem %s0, %s286
        $region52: #{encoder_layer.1} parent=47 // pred_fallthru
          _
      $region48: #{encoder_layer.1} parent=5 // pred_fallthru
        _
      %p288 = scmp.le.s32.totalorder 1, %s18
      %p289 = scmp.lt.s32.totalorder %s18, 9
      %p290 = pnand %p288, %p289
      %p291 = pneg %p290
      // Predicated region
      $region53: #{encoder_layer.1} parent=5 // pred_check
        _
      $region54: #{encoder_layer.1} parent=5 // pred_check_branch
        %293 = sbr.rel (%p290) target = $region56
      $region55: #{encoder_layer.1} parent=5 // pred_region
        %s294 = ssub.s32 %s18, 1
        %p295 = scmp.lt.s32.totalorder %s23, 7
        %s296 = scalar_select %p295, %s23, 7
        %s297 = smul.addr %s296, 8
        %s298 = scalar_lea.vmem %s0, %s297
        %p299 = pneg %p44
        %p300 = pneg %p41
        %p301 = pneg %p65
        %p302 = pneg %p62
        %p303 = pneg %p86
        %p304 = pneg %p83
        %p305 = pneg %p107
        %p306 = pneg %p104
        %p307 = pneg %p128
        %p308 = pneg %p125
        %p309 = pneg %p149
        %p310 = pneg %p146
        %p311 = pneg %p170
        %p312 = pneg %p167
        %p313 = pneg %p191
        %p314 = pneg %p188
        %p315 = pneg %p212
        %p316 = pneg %p209
        %p317 = pneg %p238
        %p318 = pneg %p235
        %s319 = sand.u32 %s225, 1
        %s320 = scalar_lea.sflag [#allocation3], %s319
        %s321 = sand.u32 %s225, 1
        %s322 = smul.addr %s321, 8
        %s323 = scalar_lea.vmem [#allocation2], %s322
        %p324 = scmp.lt.s32.totalorder %s23, 7
        %s325 = scalar_select %p324, %s23, 7
        %s326 = smul.addr %s325, 8
        %s327 = scalar_lea.vmem %s0, %s326
        %v328 = vld [vmem:[%s327] sm:$0xff]
        %v329 = vld [vmem:[%s2] sm:$0xff]
        %v330 = vld [vmem:[%s2 + $0x8] sm:$0xff]
        %v331 = vld [vmem:[%s2 + $0x10] sm:$0xff]
        %v332 = vld [vmem:[%s2 + $0x18] sm:$0xff]
        %v333 = vld [vmem:[%s3] sm:$0x1]
        %v335 = vlaneseq
        %v336 = vshrl.u32 %v335, 7
        %v337 = vsub.s32 0, %v336
        %v338 = vrot.slane %v333, %v337
        %vm340 = vcmask 261120
        %v342 = vsel %vm340, %v328, 0
        %344 = vmatprep.subr.mxu0 0.0
        %345 = vmatpush1.msra.mxu0 %v329
        %346 = vmatprep.subr.mxu0 0.0
        %347 = vmatpush1.msra.mxu0 %v330
        %348 = vmatprep.subr.mxu0 0.0
        %349 = vmatpush1.msra.mxu0 %v331
        %350 = vmatprep.subr.mxu0 0.0
        %351 = vmatpush1.msra.mxu0 %v332
        %352 = vmatprep.subr.mxu0 0.0
        %353 = vmatpush1.msra.mxu0 0.0
        %354 = vmatprep.subr.mxu0 0.0
        %355 = vmatpush1.msra.mxu0 0.0
        %356 = vmatprep.subr.mxu0 0.0
        %357 = vmatpush1.msra.mxu0 0.0
        %358 = vmatprep.subr.mxu0 0.0
        %359 = vmatpush1.msra.mxu0 0.0
        %360 = vmatprep.subr.mxu0 0.0
        %361 = vmatpush1.msra.mxu0 0.0
        %362 = vmatprep.subr.mxu0 0.0
        %363 = vmatpush1.msra.mxu0 0.0
        %364 = vmatprep.subr.mxu0 0.0
        %365 = vmatpush1.msra.mxu0 0.0
        %366 = vmatprep.subr.mxu0 0.0
        %367 = vmatpush1.msra.mxu0 0.0
        %368 = vmatprep.subr.mxu0 0.0
        %369 = vmatpush1.msra.mxu0 0.0
        %370 = vmatprep.subr.mxu0 0.0
        %371 = vmatpush1.msra.mxu0 0.0
        %372 = vmatprep.subr.mxu0 0.0
        %373 = vmatpush1.msra.mxu0 0.0
        %374 = vmatprep.subr.mxu0 0.0
        %375 = vmatpush1.msra.mxu0 0.0
        %376 = vmatprep.subr.mxu0 0.0
        %377 = vmatpush1.msra.mxu0 0.0
        %378 = vmatprep.subr.mxu0 0.0
        %379 = vmatpush1.msra.mxu0 0.0
        %380 = vmatprep.subr.mxu0 0.0
        %381 = vmatpush1.msra.mxu0 0.0
        %382 = vmatprep.subr.mxu0 0.0
        %383 = vmatpush1.msra.mxu0 0.0
        %384 = vmatprep.subr.mxu0 0.0
        %385 = vmatpush1.msra.mxu0 0.0
        %386 = vmatprep.subr.mxu0 0.0
        %387 = vmatpush1.msra.mxu0 0.0
        %388 = vmatprep.subr.mxu0 0.0
        %389 = vmatpush1.msra.mxu0 0.0
        %390 = vmatprep.subr.mxu0 0.0
        %391 = vmatpush1.msra.mxu0 0.0
        %392 = vmatprep.subr.mxu0 0.0
        %393 = vmatpush1.msra.mxu0 0.0
        %394 = vmatprep.subr.mxu0 0.0
        %395 = vmatpush1.msra.mxu0 0.0
        %396 = vmatprep.subr.mxu0 0.0
        %397 = vmatpush1.msra.mxu0 0.0
        %398 = vmatprep.subr.mxu0 0.0
        %399 = vmatpush1.msra.mxu0 0.0
        %400 = vmatprep.subr.mxu0 0.0
        %401 = vmatpush1.msra.mxu0 0.0
        %402 = vmatprep.subr.mxu0 0.0
        %403 = vmatpush1.msra.mxu0 0.0
        %404 = vmatprep.subr.mxu0 0.0
        %405 = vmatpush1.msra.mxu0 0.0
        %406 = vmatprep.subr.mxu0 0.0
        %407 = vmatpush1.msra.mxu0 0.0
        %408 = vmatprep.mubr.f32.mxu0 0.0
        %409 = vmatmul.mubr.f32.gmra.mrb[0].mxu0 %v342
        %v410 = vpop.f32.mrb[0].mxu0
        %v411 = vadd.f32 %v338, %v410
        %v412 = vpop.f32.mrb[0].mxu0
        %413 = vdwg.mxu0
        %v414 = vld [vmem:[%s1] sm:$0xff]
        %v415 = vld [vmem:[%s5] sm:$0xf]
        %417 = vrot.lane.b32.xlu0 %v411, 96
        %v418 = vpop.permute.xlu0 %417
        %vm419 = vcmask 64512
        %v420 = vsel %vm419, %v411, 0
        %v422 = vsel %vm419, %v418, 0
        %424 = vmatprep.subr.mxu0 0.0
        %425 = vmatpush1.xpose.msra.mxu0 %v422
        %426 = vmatprep.subr.mxu0 0.0
        %427 = vmatpush1.xpose.msra.mxu0 0.0
        %428 = vmatprep.subr.mxu0 0.0
        %429 = vmatpush1.xpose.msra.mxu0 0.0
        %430 = vmatprep.subr.mxu0 0.0
        %431 = vmatpush1.xpose.msra.mxu0 0.0
        %432 = vmatprep.subr.mxu0 0.0
        %433 = vmatpush1.xpose.msra.mxu0 0.0
        %434 = vmatprep.subr.mxu0 0.0
        %435 = vmatpush1.xpose.msra.mxu0 0.0
        %436 = vmatprep.subr.mxu0 0.0
        %437 = vmatpush1.xpose.msra.mxu0 0.0
        %438 = vmatprep.subr.mxu0 0.0
        %439 = vmatpush1.xpose.msra.mxu0 0.0
        %440 = vmatprep.subr.mxu0 0.0
        %441 = vmatpush1.xpose.msra.mxu0 0.0
        %442 = vmatprep.subr.mxu0 0.0
        %443 = vmatpush1.xpose.msra.mxu0 0.0
        %444 = vmatprep.subr.mxu0 0.0
        %445 = vmatpush1.xpose.msra.mxu0 0.0
        %446 = vmatprep.subr.mxu0 0.0
        %447 = vmatpush1.xpose.msra.mxu0 0.0
        %448 = vmatprep.subr.mxu0 0.0
        %449 = vmatpush1.xpose.msra.mxu0 0.0
        %450 = vmatprep.subr.mxu0 0.0
        %451 = vmatpush1.xpose.msra.mxu0 0.0
        %452 = vmatprep.subr.mxu0 0.0
        %453 = vmatpush1.xpose.msra.mxu0 0.0
        %454 = vmatprep.subr.mxu0 0.0
        %455 = vmatpush1.xpose.msra.mxu0 0.0
        %456 = vmatprep.subr.mxu0 0.0
        %457 = vmatpush1.xpose.msra.mxu0 0.0
        %458 = vmatprep.subr.mxu0 0.0
        %459 = vmatpush1.xpose.msra.mxu0 0.0
        %460 = vmatprep.subr.mxu0 0.0
        %461 = vmatpush1.xpose.msra.mxu0 0.0
        %462 = vmatprep.subr.mxu0 0.0
        %463 = vmatpush1.xpose.msra.mxu0 0.0
        %464 = vmatprep.subr.mxu0 0.0
        %465 = vmatpush1.xpose.msra.mxu0 0.0
        %466 = vmatprep.subr.mxu0 0.0
        %467 = vmatpush1.xpose.msra.mxu0 0.0
        %468 = vmatprep.subr.mxu0 0.0
        %469 = vmatpush1.xpose.msra.mxu0 0.0
        %470 = vmatprep.subr.mxu0 0.0
        %471 = vmatpush1.xpose.msra.mxu0 0.0
        %472 = vmatprep.subr.mxu0 0.0
        %473 = vmatpush1.xpose.msra.mxu0 0.0
        %474 = vmatprep.subr.mxu0 0.0
        %475 = vmatpush1.xpose.msra.mxu0 0.0
        %476 = vmatprep.subr.mxu0 0.0
        %477 = vmatpush1.xpose.msra.mxu0 0.0
        %478 = vmatprep.subr.mxu0 0.0
        %479 = vmatpush1.xpose.msra.mxu0 0.0
        %480 = vmatprep.subr.mxu0 0.0
        %481 = vmatpush1.xpose.msra.mxu0 0.0
        %482 = vmatprep.subr.mxu0 0.0
        %483 = vmatpush1.xpose.msra.mxu0 0.0
        %484 = vmatprep.subr.mxu0 0.0
        %485 = vmatpush1.xpose.msra.mxu0 0.0
        %486 = vmatprep.subr.mxu0 0.0
        %487 = vmatpush1.xpose.msra.mxu0 0.0
        %488 = vmatprep.mubr.f32.mxu0 0.0
        %489 = vmatmul.mubr.f32.gmra.mrb[0].mxu0 %v420
        %v490 = vpop.f32.mrb[0].mxu0
        %v491 = vadd.f32 0.0, %v490
        %v492 = vpop.f32.mrb[0].mxu0
        %493 = vdwg.mxu0
        %vm494 = vcmp.eq.s32.totalorder %v414, 0
        %v495 = vsel %vm494, -1e+10, %v491
        %v496 = vsel %vm419, %v495, -inf
        %497 = vmax.xlane.f32.xlu0 %v496
        %v498 = vpop.xlane.xlu0 %497
        %v499 = vsub.f32 %v495, %v498
        %v500 = vmul.f32 %v499, 1.442695
        %v501 = vpow.pop %v500
        %v502 = vsel %vm419, %v501, 0.0
        %503 = vadd.xlane.f32.xlu0 %v502
        %v504 = vpop.xlane.xlu0 %503
        %v505 = vrcp.pop %v504
        %v506 = vmul.f32 %v501, %v505
        %507 = vrot.lane.b32.xlu0 %v411, 64
        %v508 = vpop.permute.xlu0 %507
        %v511 = vsel %vm419, %v506, 0
        %513 = vmatprep.subr.mxu0 0.0
        %514 = vmatpush1.msra.mxu0 %v508
        %515 = vmatprep.subr.mxu0 0.0
        %516 = vmatpush1.msra.mxu0 0.0
        %517 = vmatprep.subr.mxu0 0.0
        %518 = vmatpush1.msra.mxu0 0.0
        %519 = vmatprep.subr.mxu0 0.0
        %520 = vmatpush1.msra.mxu0 0.0
        %521 = vmatprep.subr.mxu0 0.0
        %522 = vmatpush1.msra.mxu0 0.0
        %523 = vmatprep.subr.mxu0 0.0
        %524 = vmatpush1.msra.mxu0 0.0
        %525 = vmatprep.subr.mxu0 0.0
        %526 = vmatpush1.msra.mxu0 0.0
        %527 = vmatprep.subr.mxu0 0.0
        %528 = vmatpush1.msra.mxu0 0.0
        %529 = vmatprep.subr.mxu0 0.0
        %530 = vmatpush1.msra.mxu0 0.0
        %531 = vmatprep.subr.mxu0 0.0
        %532 = vmatpush1.msra.mxu0 0.0
        %533 = vmatprep.subr.mxu0 0.0
        %534 = vmatpush1.msra.mxu0 0.0
        %535 = vmatprep.subr.mxu0 0.0
        %536 = vmatpush1.msra.mxu0 0.0
        %537 = vmatprep.subr.mxu0 0.0
        %538 = vmatpush1.msra.mxu0 0.0
        %539 = vmatprep.subr.mxu0 0.0
        %540 = vmatpush1.msra.mxu0 0.0
        %541 = vmatprep.subr.mxu0 0.0
        %542 = vmatpush1.msra.mxu0 0.0
        %543 = vmatprep.subr.mxu0 0.0
        %544 = vmatpush1.msra.mxu0 0.0
        %545 = vmatprep.subr.mxu0 0.0
        %546 = vmatpush1.msra.mxu0 0.0
        %547 = vmatprep.subr.mxu0 0.0
        %548 = vmatpush1.msra.mxu0 0.0
        %549 = vmatprep.subr.mxu0 0.0
        %550 = vmatpush1.msra.mxu0 0.0
        %551 = vmatprep.subr.mxu0 0.0
        %552 = vmatpush1.msra.mxu0 0.0
        %553 = vmatprep.subr.mxu0 0.0
        %554 = vmatpush1.msra.mxu0 0.0
        %555 = vmatprep.subr.mxu0 0.0
        %556 = vmatpush1.msra.mxu0 0.0
        %557 = vmatprep.subr.mxu0 0.0
        %558 = vmatpush1.msra.mxu0 0.0
        %559 = vmatprep.subr.mxu0 0.0
        %560 = vmatpush1.msra.mxu0 0.0
        %561 = vmatprep.subr.mxu0 0.0
        %562 = vmatpush1.msra.mxu0 0.0
        %563 = vmatprep.subr.mxu0 0.0
        %564 = vmatpush1.msra.mxu0 0.0
        %565 = vmatprep.subr.mxu0 0.0
        %566 = vmatpush1.msra.mxu0 0.0
        %567 = vmatprep.subr.mxu0 0.0
        %568 = vmatpush1.msra.mxu0 0.0
        %569 = vmatprep.subr.mxu0 0.0
        %570 = vmatpush1.msra.mxu0 0.0
        %571 = vmatprep.subr.mxu0 0.0
        %572 = vmatpush1.msra.mxu0 0.0
        %573 = vmatprep.subr.mxu0 0.0
        %574 = vmatpush1.msra.mxu0 0.0
        %575 = vmatprep.subr.mxu0 0.0
        %576 = vmatpush1.msra.mxu0 0.0
        %577 = vmatprep.mubr.f32.mxu0 0.0
        %578 = vmatmul.mubr.f32.gmra.mrb[0].mxu0 %v511
        %v579 = vpop.f32.mrb[0].mxu0
        %v580 = vadd.f32 0.0, %v579
        %v581 = vpop.f32.mrb[0].mxu0
        %582 = vdwg.mxu0
        %583 = vrot.lane.b32.xlu0 %v411, 120
        %v584 = vpop.permute.xlu0 %583
        %585 = vrot.lane.b32.xlu0 %v411, 88
        %v586 = vpop.permute.xlu0 %585
        %v587 = vsel %vm419, %v584, 0
        %v589 = vsel %vm419, %v586, 0
        %591 = vmatprep.subr.mxu0 0.0
        %592 = vmatpush1.xpose.msra.mxu0 %v589
        %593 = vmatprep.subr.mxu0 0.0
        %594 = vmatpush1.xpose.msra.mxu0 0.0
        %595 = vmatprep.subr.mxu0 0.0
        %596 = vmatpush1.xpose.msra.mxu0 0.0
        %597 = vmatprep.subr.mxu0 0.0
        %598 = vmatpush1.xpose.msra.mxu0 0.0
        %599 = vmatprep.subr.mxu0 0.0
        %600 = vmatpush1.xpose.msra.mxu0 0.0
        %601 = vmatprep.subr.mxu0 0.0
        %602 = vmatpush1.xpose.msra.mxu0 0.0
        %603 = vmatprep.subr.mxu0 0.0
        %604 = vmatpush1.xpose.msra.mxu0 0.0
        %605 = vmatprep.subr.mxu0 0.0
        %606 = vmatpush1.xpose.msra.mxu0 0.0
        %607 = vmatprep.subr.mxu0 0.0
        %608 = vmatpush1.xpose.msra.mxu0 0.0
        %609 = vmatprep.subr.mxu0 0.0
        %610 = vmatpush1.xpose.msra.mxu0 0.0
        %611 = vmatprep.subr.mxu0 0.0
        %612 = vmatpush1.xpose.msra.mxu0 0.0
        %613 = vmatprep.subr.mxu0 0.0
        %614 = vmatpush1.xpose.msra.mxu0 0.0
        %615 = vmatprep.subr.mxu0 0.0
        %616 = vmatpush1.xpose.msra.mxu0 0.0
        %617 = vmatprep.subr.mxu0 0.0
        %618 = vmatpush1.xpose.msra.mxu0 0.0
        %619 = vmatprep.subr.mxu0 0.0
        %620 = vmatpush1.xpose.msra.mxu0 0.0
        %621 = vmatprep.subr.mxu0 0.0
        %622 = vmatpush1.xpose.msra.mxu0 0.0
        %623 = vmatprep.subr.mxu0 0.0
        %624 = vmatpush1.xpose.msra.mxu0 0.0
        %625 = vmatprep.subr.mxu0 0.0
        %626 = vmatpush1.xpose.msra.mxu0 0.0
        %627 = vmatprep.subr.mxu0 0.0
        %628 = vmatpush1.xpose.msra.mxu0 0.0
        %629 = vmatprep.subr.mxu0 0.0
        %630 = vmatpush1.xpose.msra.mxu0 0.0
        %631 = vmatprep.subr.mxu0 0.0
        %632 = vmatpush1.xpose.msra.mxu0 0.0
        %633 = vmatprep.subr.mxu0 0.0
        %634 = vmatpush1.xpose.msra.mxu0 0.0
        %635 = vmatprep.subr.mxu0 0.0
        %636 = vmatpush1.xpose.msra.mxu0 0.0
        %637 = vmatprep.subr.mxu0 0.0
        %638 = vmatpush1.xpose.msra.mxu0 0.0
        %639 = vmatprep.subr.mxu0 0.0
        %640 = vmatpush1.xpose.msra.mxu0 0.0
        %641 = vmatprep.subr.mxu0 0.0
        %642 = vmatpush1.xpose.msra.mxu0 0.0
        %643 = vmatprep.subr.mxu0 0.0
        %644 = vmatpush1.xpose.msra.mxu0 0.0
        %645 = vmatprep.subr.mxu0 0.0
        %646 = vmatpush1.xpose.msra.mxu0 0.0
        %647 = vmatprep.subr.mxu0 0.0
        %648 = vmatpush1.xpose.msra.mxu0 0.0
        %649 = vmatprep.subr.mxu0 0.0
        %650 = vmatpush1.xpose.msra.mxu0 0.0
        %651 = vmatprep.subr.mxu0 0.0
        %652 = vmatpush1.xpose.msra.mxu0 0.0
        %653 = vmatprep.subr.mxu0 0.0
        %654 = vmatpush1.xpose.msra.mxu0 0.0
        %655 = vmatprep.mubr.f32.mxu0 0.0
        %656 = vmatmul.mubr.f32.gmra.mrb[0].mxu0 %v587
        %v657 = vpop.f32.mrb[0].mxu0
        %v658 = vadd.f32 0.0, %v657
        %v659 = vpop.f32.mrb[0].mxu0
        %660 = vdwg.mxu0
        %v661 = vsel %vm494, -1e+10, %v658
        %v662 = vsel %vm419, %v661, -inf
        %663 = vmax.xlane.f32.xlu0 %v662
        %v664 = vpop.xlane.xlu0 %663
        %v665 = vsub.f32 %v661, %v664
        %v666 = vmul.f32 %v665, 1.442695
        %v667 = vpow.pop %v666
        %v668 = vsel %vm419, %v667, 0.0
        %669 = vadd.xlane.f32.xlu0 %v668
        %v670 = vpop.xlane.xlu0 %669
        %v671 = vrcp.pop %v670
        %v672 = vmul.f32 %v667, %v671
        %673 = vrot.lane.b32.xlu0 %v411, 56
        %v674 = vpop.permute.xlu0 %673
        %v677 = vsel %vm419, %v672, 0
        %679 = vmatprep.subr.mxu0 0.0
        %680 = vmatpush1.msra.mxu0 %v674
        %681 = vmatprep.subr.mxu0 0.0
        %682 = vmatpush1.msra.mxu0 0.0
        %683 = vmatprep.subr.mxu0 0.0
        %684 = vmatpush1.msra.mxu0 0.0
        %685 = vmatprep.subr.mxu0 0.0
        %686 = vmatpush1.msra.mxu0 0.0
        %687 = vmatprep.subr.mxu0 0.0
        %688 = vmatpush1.msra.mxu0 0.0
        %689 = vmatprep.subr.mxu0 0.0
        %690 = vmatpush1.msra.mxu0 0.0
        %691 = vmatprep.subr.mxu0 0.0
        %692 = vmatpush1.msra.mxu0 0.0
        %693 = vmatprep.subr.mxu0 0.0
        %694 = vmatpush1.msra.mxu0 0.0
        %695 = vmatprep.subr.mxu0 0.0
        %696 = vmatpush1.msra.mxu0 0.0
        %697 = vmatprep.subr.mxu0 0.0
        %698 = vmatpush1.msra.mxu0 0.0
        %699 = vmatprep.subr.mxu0 0.0
        %700 = vmatpush1.msra.mxu0 0.0
        %701 = vmatprep.subr.mxu0 0.0
        %702 = vmatpush1.msra.mxu0 0.0
        %703 = vmatprep.subr.mxu0 0.0
        %704 = vmatpush1.msra.mxu0 0.0
        %705 = vmatprep.subr.mxu0 0.0
        %706 = vmatpush1.msra.mxu0 0.0
        %707 = vmatprep.subr.mxu0 0.0
        %708 = vmatpush1.msra.mxu0 0.0
        %709 = vmatprep.subr.mxu0 0.0
        %710 = vmatpush1.msra.mxu0 0.0
        %711 = vmatprep.subr.mxu0 0.0
        %712 = vmatpush1.msra.mxu0 0.0
        %713 = vmatprep.subr.mxu0 0.0
        %714 = vmatpush1.msra.mxu0 0.0
        %715 = vmatprep.subr.mxu0 0.0
        %716 = vmatpush1.msra.mxu0 0.0
        %717 = vmatprep.subr.mxu0 0.0
        %718 = vmatpush1.msra.mxu0 0.0
        %719 = vmatprep.subr.mxu0 0.0
        %720 = vmatpush1.msra.mxu0 0.0
        %721 = vmatprep.subr.mxu0 0.0
        %722 = vmatpush1.msra.mxu0 0.0
        %723 = vmatprep.subr.mxu0 0.0
        %724 = vmatpush1.msra.mxu0 0.0
        %725 = vmatprep.subr.mxu0 0.0
        %726 = vmatpush1.msra.mxu0 0.0
        %727 = vmatprep.subr.mxu0 0.0
        %728 = vmatpush1.msra.mxu0 0.0
        %729 = vmatprep.subr.mxu0 0.0
        %730 = vmatpush1.msra.mxu0 0.0
        %731 = vmatprep.subr.mxu0 0.0
        %732 = vmatpush1.msra.mxu0 0.0
        %733 = vmatprep.subr.mxu0 0.0
        %734 = vmatpush1.msra.mxu0 0.0
        %735 = vmatprep.subr.mxu0 0.0
        %736 = vmatpush1.msra.mxu0 0.0
        %737 = vmatprep.subr.mxu0 0.0
        %738 = vmatpush1.msra.mxu0 0.0
        %739 = vmatprep.subr.mxu0 0.0
        %740 = vmatpush1.msra.mxu0 0.0
        %741 = vmatprep.subr.mxu0 0.0
        %742 = vmatpush1.msra.mxu0 0.0
        %743 = vmatprep.mubr.f32.mxu0 0.0
        %744 = vmatmul.mubr.f32.gmra.mrb[0].mxu0 %v677
        %v745 = vpop.f32.mrb[0].mxu0
        %v746 = vadd.f32 0.0, %v745
        %v747 = vpop.f32.mrb[0].mxu0
        %748 = vdwg.mxu0
        %749 = vrot.lane.b32.xlu0 %v411, 112
        %v750 = vpop.permute.xlu0 %749
        %751 = vrot.lane.b32.xlu0 %v411, 80
        %v752 = vpop.permute.xlu0 %751
        %v753 = vsel %vm419, %v750, 0
        %v755 = vsel %vm419, %v752, 0
        %757 = vmatprep.subr.mxu0 0.0
        %758 = vmatpush1.xpose.msra.mxu0 %v755
        %759 = vmatprep.subr.mxu0 0.0
        %760 = vmatpush1.xpose.msra.mxu0 0.0
        %761 = vmatprep.subr.mxu0 0.0
        %762 = vmatpush1.xpose.msra.mxu0 0.0
        %763 = vmatprep.subr.mxu0 0.0
        %764 = vmatpush1.xpose.msra.mxu0 0.0
        %765 = vmatprep.subr.mxu0 0.0
        %766 = vmatpush1.xpose.msra.mxu0 0.0
        %767 = vmatprep.subr.mxu0 0.0
        %768 = vmatpush1.xpose.msra.mxu0 0.0
        %769 = vmatprep.subr.mxu0 0.0
        %770 = vmatpush1.xpose.msra.mxu0 0.0
        %771 = vmatprep.subr.mxu0 0.0
        %772 = vmatpush1.xpose.msra.mxu0 0.0
        %773 = vmatprep.subr.mxu0 0.0
        %774 = vmatpush1.xpose.msra.mxu0 0.0
        %775 = vmatprep.subr.mxu0 0.0
        %776 = vmatpush1.xpose.msra.mxu0 0.0
        %777 = vmatprep.subr.mxu0 0.0
        %778 = vmatpush1.xpose.msra.mxu0 0.0
        %779 = vmatprep.subr.mxu0 0.0
        %780 = vmatpush1.xpose.msra.mxu0 0.0
        %781 = vmatprep.subr.mxu0 0.0
        %782 = vmatpush1.xpose.msra.mxu0 0.0
        %783 = vmatprep.subr.mxu0 0.0
        %784 = vmatpush1.xpose.msra.mxu0 0.0
        %785 = vmatprep.subr.mxu0 0.0
        %786 = vmatpush1.xpose.msra.mxu0 0.0
        %787 = vmatprep.subr.mxu0 0.0
        %788 = vmatpush1.xpose.msra.mxu0 0.0
        %789 = vmatprep.subr.mxu0 0.0
        %790 = vmatpush1.xpose.msra.mxu0 0.0
        %791 = vmatprep.subr.mxu0 0.0
        %792 = vmatpush1.xpose.msra.mxu0 0.0
        %793 = vmatprep.subr.mxu0 0.0
        %794 = vmatpush1.xpose.msra.mxu0 0.0
        %795 = vmatprep.subr.mxu0 0.0
        %796 = vmatpush1.xpose.msra.mxu0 0.0
        %797 = vmatprep.subr.mxu0 0.0
        %798 = vmatpush1.xpose.msra.mxu0 0.0
        %799 = vmatprep.subr.mxu0 0.0
        %800 = vmatpush1.xpose.msra.mxu0 0.0
        %801 = vmatprep.subr.mxu0 0.0
        %802 = vmatpush1.xpose.msra.mxu0 0.0
        %803 = vmatprep.subr.mxu0 0.0
        %804 = vmatpush1.xpose.msra.mxu0 0.0
        %805 = vmatprep.subr.mxu0 0.0
        %806 = vmatpush1.xpose.msra.mxu0 0.0
        %807 = vmatprep.subr.mxu0 0.0
        %808 = vmatpush1.xpose.msra.mxu0 0.0
        %809 = vmatprep.subr.mxu0 0.0
        %810 = vmatpush1.xpose.msra.mxu0 0.0
        %811 = vmatprep.subr.mxu0 0.0
        %812 = vmatpush1.xpose.msra.mxu0 0.0
        %813 = vmatprep.subr.mxu0 0.0
        %814 = vmatpush1.xpose.msra.mxu0 0.0
        %815 = vmatprep.subr.mxu0 0.0
        %816 = vmatpush1.xpose.msra.mxu0 0.0
        %817 = vmatprep.subr.mxu0 0.0
        %818 = vmatpush1.xpose.msra.mxu0 0.0
        %819 = vmatprep.subr.mxu0 0.0
        %820 = vmatpush1.xpose.msra.mxu0 0.0
        %821 = vmatprep.mubr.f32.mxu0 0.0
        %822 = vmatmul.mubr.f32.gmra.mrb[0].mxu0 %v753
        %v823 = vpop.f32.mrb[0].mxu0
        %v824 = vadd.f32 0.0, %v823
        %v825 = vpop.f32.mrb[0].mxu0
        %826 = vdwg.mxu0
        %v827 = vsel %vm494, -1e+10, %v824
        %v828 = vsel %vm419, %v827, -inf
        %829 = vmax.xlane.f32.xlu0 %v828
        %v830 = vpop.xlane.xlu0 %829
        %v831 = vsub.f32 %v827, %v830
        %v832 = vmul.f32 %v831, 1.442695
        %v833 = vpow.pop %v832
        %v834 = vsel %vm419, %v833, 0.0
        %835 = vadd.xlane.f32.xlu0 %v834
        %v836 = vpop.xlane.xlu0 %835
        %v837 = vrcp.pop %v836
        %v838 = vmul.f32 %v833, %v837
        %839 = vrot.lane.b32.xlu0 %v411, 48
        %v840 = vpop.permute.xlu0 %839
        %v843 = vsel %vm419, %v838, 0
        %845 = vmatprep.subr.mxu0 0.0
        %846 = vmatpush1.msra.mxu0 %v840
        %847 = vmatprep.subr.mxu0 0.0
        %848 = vmatpush1.msra.mxu0 0.0
        %849 = vmatprep.subr.mxu0 0.0
        %850 = vmatpush1.msra.mxu0 0.0
        %851 = vmatprep.subr.mxu0 0.0
        %852 = vmatpush1.msra.mxu0 0.0
        %853 = vmatprep.subr.mxu0 0.0
        %854 = vmatpush1.msra.mxu0 0.0
        %855 = vmatprep.subr.mxu0 0.0
        %856 = vmatpush1.msra.mxu0 0.0
        %857 = vmatprep.subr.mxu0 0.0
        %858 = vmatpush1.msra.mxu0 0.0
        %859 = vmatprep.subr.mxu0 0.0
        %860 = vmatpush1.msra.mxu0 0.0
        %861 = vmatprep.subr.mxu0 0.0
        %862 = vmatpush1.msra.mxu0 0.0
        %863 = vmatprep.subr.mxu0 0.0
        %864 = vmatpush1.msra.mxu0 0.0
        %865 = vmatprep.subr.mxu0 0.0
        %866 = vmatpush1.msra.mxu0 0.0
        %867 = vmatprep.subr.mxu0 0.0
        %868 = vmatpush1.msra.mxu0 0.0
        %869 = vmatprep.subr.mxu0 0.0
        %870 = vmatpush1.msra.mxu0 0.0
        %871 = vmatprep.subr.mxu0 0.0
        %872 = vmatpush1.msra.mxu0 0.0
        %873 = vmatprep.subr.mxu0 0.0
        %874 = vmatpush1.msra.mxu0 0.0
        %875 = vmatprep.subr.mxu0 0.0
        %876 = vmatpush1.msra.mxu0 0.0
        %877 = vmatprep.subr.mxu0 0.0
        %878 = vmatpush1.msra.mxu0 0.0
        %879 = vmatprep.subr.mxu0 0.0
        %880 = vmatpush1.msra.mxu0 0.0
        %881 = vmatprep.subr.mxu0 0.0
        %882 = vmatpush1.msra.mxu0 0.0
        %883 = vmatprep.subr.mxu0 0.0
        %884 = vmatpush1.msra.mxu0 0.0
        %885 = vmatprep.subr.mxu0 0.0
        %886 = vmatpush1.msra.mxu0 0.0
        %887 = vmatprep.subr.mxu0 0.0
        %888 = vmatpush1.msra.mxu0 0.0
        %889 = vmatprep.subr.mxu0 0.0
        %890 = vmatpush1.msra.mxu0 0.0
        %891 = vmatprep.subr.mxu0 0.0
        %892 = vmatpush1.msra.mxu0 0.0
        %893 = vmatprep.subr.mxu0 0.0
        %894 = vmatpush1.msra.mxu0 0.0
        %895 = vmatprep.subr.mxu0 0.0
        %896 = vmatpush1.msra.mxu0 0.0
        %897 = vmatprep.subr.mxu0 0.0
        %898 = vmatpush1.msra.mxu0 0.0
        %899 = vmatprep.subr.mxu0 0.0
        %900 = vmatpush1.msra.mxu0 0.0
        %901 = vmatprep.subr.mxu0 0.0
        %902 = vmatpush1.msra.mxu0 0.0
        %903 = vmatprep.subr.mxu0 0.0
        %904 = vmatpush1.msra.mxu0 0.0
        %905 = vmatprep.subr.mxu0 0.0
        %906 = vmatpush1.msra.mxu0 0.0
        %907 = vmatprep.subr.mxu0 0.0
        %908 = vmatpush1.msra.mxu0 0.0
        %909 = vmatprep.mubr.f32.mxu0 0.0
        %910 = vmatmul.mubr.f32.gmra.mrb[0].mxu0 %v843
        %v911 = vpop.f32.mrb[0].mxu0
        %v912 = vadd.f32 0.0, %v911
        %v913 = vpop.f32.mrb[0].mxu0
        %914 = vdwg.mxu0
        %915 = vrot.lane.b32.xlu0 %v411, 104
        %v916 = vpop.permute.xlu0 %915
        %917 = vrot.lane.b32.xlu0 %v411, 72
        %v918 = vpop.permute.xlu0 %917
        %v919 = vsel %vm419, %v916, 0
        %v921 = vsel %vm419, %v918, 0
        %923 = vmatprep.subr.mxu0 0.0
        %924 = vmatpush1.xpose.msra.mxu0 %v921
        %925 = vmatprep.subr.mxu0 0.0
        %926 = vmatpush1.xpose.msra.mxu0 0.0
        %927 = vmatprep.subr.mxu0 0.0
        %928 = vmatpush1.xpose.msra.mxu0 0.0
        %929 = vmatprep.subr.mxu0 0.0
        %930 = vmatpush1.xpose.msra.mxu0 0.0
        %931 = vmatprep.subr.mxu0 0.0
        %932 = vmatpush1.xpose.msra.mxu0 0.0
        %933 = vmatprep.subr.mxu0 0.0
        %934 = vmatpush1.xpose.msra.mxu0 0.0
        %935 = vmatprep.subr.mxu0 0.0
        %936 = vmatpush1.xpose.msra.mxu0 0.0
        %937 = vmatprep.subr.mxu0 0.0
        %938 = vmatpush1.xpose.msra.mxu0 0.0
        %939 = vmatprep.subr.mxu0 0.0
        %940 = vmatpush1.xpose.msra.mxu0 0.0
        %941 = vmatprep.subr.mxu0 0.0
        %942 = vmatpush1.xpose.msra.mxu0 0.0
        %943 = vmatprep.subr.mxu0 0.0
        %944 = vmatpush1.xpose.msra.mxu0 0.0
        %945 = vmatprep.subr.mxu0 0.0
        %946 = vmatpush1.xpose.msra.mxu0 0.0
        %947 = vmatprep.subr.mxu0 0.0
        %948 = vmatpush1.xpose.msra.mxu0 0.0
        %949 = vmatprep.subr.mxu0 0.0
        %950 = vmatpush1.xpose.msra.mxu0 0.0
        %951 = vmatprep.subr.mxu0 0.0
        %952 = vmatpush1.xpose.msra.mxu0 0.0
        %953 = vmatprep.subr.mxu0 0.0
        %954 = vmatpush1.xpose.msra.mxu0 0.0
        %955 = vmatprep.subr.mxu0 0.0
        %956 = vmatpush1.xpose.msra.mxu0 0.0
        %957 = vmatprep.subr.mxu0 0.0
        %958 = vmatpush1.xpose.msra.mxu0 0.0
        %959 = vmatprep.subr.mxu0 0.0
        %960 = vmatpush1.xpose.msra.mxu0 0.0
        %961 = vmatprep.subr.mxu0 0.0
        %962 = vmatpush1.xpose.msra.mxu0 0.0
        %963 = vmatprep.subr.mxu0 0.0
        %964 = vmatpush1.xpose.msra.mxu0 0.0
        %965 = vmatprep.subr.mxu0 0.0
        %966 = vmatpush1.xpose.msra.mxu0 0.0
        %967 = vmatprep.subr.mxu0 0.0
        %968 = vmatpush1.xpose.msra.mxu0 0.0
        %969 = vmatprep.subr.mxu0 0.0
        %970 = vmatpush1.xpose.msra.mxu0 0.0
        %971 = vmatprep.subr.mxu0 0.0
        %972 = vmatpush1.xpose.msra.mxu0 0.0
        %973 = vmatprep.subr.mxu0 0.0
        %974 = vmatpush1.xpose.msra.mxu0 0.0
        %975 = vmatprep.subr.mxu0 0.0
        %976 = vmatpush1.xpose.msra.mxu0 0.0
        %977 = vmatprep.subr.mxu0 0.0
        %978 = vmatpush1.xpose.msra.mxu0 0.0
        %979 = vmatprep.subr.mxu0 0.0
        %980 = vmatpush1.xpose.msra.mxu0 0.0
        %981 = vmatprep.subr.mxu0 0.0
        %982 = vmatpush1.xpose.msra.mxu0 0.0
        %983 = vmatprep.subr.mxu0 0.0
        %984 = vmatpush1.xpose.msra.mxu0 0.0
        %985 = vmatprep.subr.mxu0 0.0
        %986 = vmatpush1.xpose.msra.mxu0 0.0
        %987 = vmatprep.mubr.f32.mxu0 0.0
        %988 = vmatmul.mubr.f32.gmra.mrb[0].mxu0 %v919
        %v989 = vpop.f32.mrb[0].mxu0
        %v990 = vadd.f32 0.0, %v989
        %v991 = vpop.f32.mrb[0].mxu0
        %992 = vdwg.mxu0
        %v993 = vsel %vm494, -1e+10, %v990
        %v994 = vsel %vm419, %v993, -inf
        %995 = vmax.xlane.f32.xlu0 %v994
        %v996 = vpop.xlane.xlu0 %995
        %v997 = vsub.f32 %v993, %v996
        %v998 = vmul.f32 %v997, 1.442695
        %v999 = vpow.pop %v998
        %v1000 = vsel %vm419, %v999, 0.0
        %1001 = vadd.xlane.f32.xlu0 %v1000
        %v1002 = vpop.xlane.xlu0 %1001
        %v1003 = vrcp.pop %v1002
        %v1004 = vmul.f32 %v999, %v1003
        %1005 = vrot.lane.b32.xlu0 %v411, 40
        %v1006 = vpop.permute.xlu0 %1005
        %v1009 = vsel %vm419, %v1004, 0
        %1011 = vmatprep.subr.mxu0 0.0
        %1012 = vmatpush1.msra.mxu0 %v1006
        %1013 = vmatprep.subr.mxu0 0.0
        %1014 = vmatpush1.msra.mxu0 0.0
        %1015 = vmatprep.subr.mxu0 0.0
        %1016 = vmatpush1.msra.mxu0 0.0
        %1017 = vmatprep.subr.mxu0 0.0
        %1018 = vmatpush1.msra.mxu0 0.0
        %1019 = vmatprep.subr.mxu0 0.0
        %1020 = vmatpush1.msra.mxu0 0.0
        %1021 = vmatprep.subr.mxu0 0.0
        %1022 = vmatpush1.msra.mxu0 0.0
        %1023 = vmatprep.subr.mxu0 0.0
        %1024 = vmatpush1.msra.mxu0 0.0
        %1025 = vmatprep.subr.mxu0 0.0
        %1026 = vmatpush1.msra.mxu0 0.0
        %1027 = vmatprep.subr.mxu0 0.0
        %1028 = vmatpush1.msra.mxu0 0.0
        %1029 = vmatprep.subr.mxu0 0.0
        %1030 = vmatpush1.msra.mxu0 0.0
        %1031 = vmatprep.subr.mxu0 0.0
        %1032 = vmatpush1.msra.mxu0 0.0
        %1033 = vmatprep.subr.mxu0 0.0
        %1034 = vmatpush1.msra.mxu0 0.0
        %1035 = vmatprep.subr.mxu0 0.0
        %1036 = vmatpush1.msra.mxu0 0.0
        %1037 = vmatprep.subr.mxu0 0.0
        %1038 = vmatpush1.msra.mxu0 0.0
        %1039 = vmatprep.subr.mxu0 0.0
        %1040 = vmatpush1.msra.mxu0 0.0
        %1041 = vmatprep.subr.mxu0 0.0
        %1042 = vmatpush1.msra.mxu0 0.0
        %1043 = vmatprep.subr.mxu0 0.0
        %1044 = vmatpush1.msra.mxu0 0.0
        %1045 = vmatprep.subr.mxu0 0.0
        %1046 = vmatpush1.msra.mxu0 0.0
        %1047 = vmatprep.subr.mxu0 0.0
        %1048 = vmatpush1.msra.mxu0 0.0
        %1049 = vmatprep.subr.mxu0 0.0
        %1050 = vmatpush1.msra.mxu0 0.0
        %1051 = vmatprep.subr.mxu0 0.0
        %1052 = vmatpush1.msra.mxu0 0.0
        %1053 = vmatprep.subr.mxu0 0.0
        %1054 = vmatpush1.msra.mxu0 0.0
        %1055 = vmatprep.subr.mxu0 0.0
        %1056 = vmatpush1.msra.mxu0 0.0
        %1057 = vmatprep.subr.mxu0 0.0
        %1058 = vmatpush1.msra.mxu0 0.0
        %1059 = vmatprep.subr.mxu0 0.0
        %1060 = vmatpush1.msra.mxu0 0.0
        %1061 = vmatprep.subr.mxu0 0.0
        %1062 = vmatpush1.msra.mxu0 0.0
        %1063 = vmatprep.subr.mxu0 0.0
        %1064 = vmatpush1.msra.mxu0 0.0
        %1065 = vmatprep.subr.mxu0 0.0
        %1066 = vmatpush1.msra.mxu0 0.0
        %1067 = vmatprep.subr.mxu0 0.0
        %1068 = vmatpush1.msra.mxu0 0.0
        %1069 = vmatprep.subr.mxu0 0.0
        %1070 = vmatpush1.msra.mxu0 0.0
        %1071 = vmatprep.subr.mxu0 0.0
        %1072 = vmatpush1.msra.mxu0 0.0
        %1073 = vmatprep.subr.mxu0 0.0
        %1074 = vmatpush1.msra.mxu0 0.0
        %1075 = vmatprep.mubr.f32.mxu0 0.0
        %1076 = vmatmul.mubr.f32.gmra.mrb[0].mxu0 %v1009
        %v1077 = vpop.f32.mrb[0].mxu0
        %v1078 = vadd.f32 0.0, %v1077
        %v1079 = vpop.f32.mrb[0].mxu0
        %1080 = vdwg.mxu0
        %1082 = vrot.lane.b32.xlu0 %v746, 8
        %v1083 = vpop.permute.xlu0 %1082
        %1086 = vrot.lane.b32.xlu0 %v912, 16
        %v1087 = vpop.permute.xlu0 %1086
        %1090 = vrot.lane.b32.xlu0 %v1078, 24
        %v1091 = vpop.permute.xlu0 %1090
        %v1093 = vsel %vm419, %v580, %v1083
        %vm1094 = vcmask 130048
        %v1095 = vsel %vm1094, %v1093, %v1087
        %vm1096 = vcmask 195584
        %v1097 = vsel %vm1096, %v1095, %v1091
        %v1098 = vld [vmem:[%s4] sm:$0xff]
        %v1099 = vld [vmem:[%s4 + $0x8] sm:$0xff]
        %v1100 = vld [vmem:[%s4 + $0x10] sm:$0xff]
        %v1101 = vld [vmem:[%s4 + $0x18] sm:$0xff]
        %v1102 = vlaneseq
        %v1103 = vshrl.u32 %v1102, 7
        %v1104 = vsub.s32 0, %v1103
        %v1105 = vrot.slane %v415, %v1104
        %v1107 = vsel %vm340, %v1097, 0
        %1109 = vmatprep.subr.mxu0 0.0
        %1110 = vmatpush1.msra.mxu0 %v1098
        %1111 = vmatprep.subr.mxu0 0.0
        %1112 = vmatpush1.msra.mxu0 %v1099
        %1113 = vmatprep.subr.mxu0 0.0
        %1114 = vmatpush1.msra.mxu0 %v1100
        %1115 = vmatprep.subr.mxu0 0.0
        %1116 = vmatpush1.msra.mxu0 %v1101
        %1117 = vmatprep.subr.mxu0 0.0
        %1118 = vmatpush1.msra.mxu0 0.0
        %1119 = vmatprep.subr.mxu0 0.0
        %1120 = vmatpush1.msra.mxu0 0.0
        %1121 = vmatprep.subr.mxu0 0.0
        %1122 = vmatpush1.msra.mxu0 0.0
        %1123 = vmatprep.subr.mxu0 0.0
        %1124 = vmatpush1.msra.mxu0 0.0
        %1125 = vmatprep.subr.mxu0 0.0
        %1126 = vmatpush1.msra.mxu0 0.0
        %1127 = vmatprep.subr.mxu0 0.0
        %1128 = vmatpush1.msra.mxu0 0.0
        %1129 = vmatprep.subr.mxu0 0.0
        %1130 = vmatpush1.msra.mxu0 0.0
        %1131 = vmatprep.subr.mxu0 0.0
        %1132 = vmatpush1.msra.mxu0 0.0
        %1133 = vmatprep.subr.mxu0 0.0
        %1134 = vmatpush1.msra.mxu0 0.0
        %1135 = vmatprep.subr.mxu0 0.0
        %1136 = vmatpush1.msra.mxu0 0.0
        %1137 = vmatprep.subr.mxu0 0.0
        %1138 = vmatpush1.msra.mxu0 0.0
        %1139 = vmatprep.subr.mxu0 0.0
        %1140 = vmatpush1.msra.mxu0 0.0
        %1141 = vmatprep.subr.mxu0 0.0
        %1142 = vmatpush1.msra.mxu0 0.0
        %1143 = vmatprep.subr.mxu0 0.0
        %1144 = vmatpush1.msra.mxu0 0.0
        %1145 = vmatprep.subr.mxu0 0.0
        %1146 = vmatpush1.msra.mxu0 0.0
        %1147 = vmatprep.subr.mxu0 0.0
        %1148 = vmatpush1.msra.mxu0 0.0
        %1149 = vmatprep.subr.mxu0 0.0
        %1150 = vmatpush1.msra.mxu0 0.0
        %1151 = vmatprep.subr.mxu0 0.0
        %1152 = vmatpush1.msra.mxu0 0.0
        %1153 = vmatprep.subr.mxu0 0.0
        %1154 = vmatpush1.msra.mxu0 0.0
        %1155 = vmatprep.subr.mxu0 0.0
        %1156 = vmatpush1.msra.mxu0 0.0
        %1157 = vmatprep.subr.mxu0 0.0
        %1158 = vmatpush1.msra.mxu0 0.0
        %1159 = vmatprep.subr.mxu0 0.0
        %1160 = vmatpush1.msra.mxu0 0.0
        %1161 = vmatprep.subr.mxu0 0.0
        %1162 = vmatpush1.msra.mxu0 0.0
        %1163 = vmatprep.subr.mxu0 0.0
        %1164 = vmatpush1.msra.mxu0 0.0
        %1165 = vmatprep.subr.mxu0 0.0
        %1166 = vmatpush1.msra.mxu0 0.0
        %1167 = vmatprep.subr.mxu0 0.0
        %1168 = vmatpush1.msra.mxu0 0.0
        %1169 = vmatprep.subr.mxu0 0.0
        %1170 = vmatpush1.msra.mxu0 0.0
        %1171 = vmatprep.subr.mxu0 0.0
        %1172 = vmatpush1.msra.mxu0 0.0
        %1173 = vmatprep.mubr.f32.mxu0 0.0
        %1174 = vmatmul.mubr.f32.gmra.mrb[0].mxu0 %v1107
        %v1175 = vpop.f32.mrb[0].mxu0
        %v1176 = vadd.f32 %v1105, %v1175
        %v1177 = vpop.f32.mrb[0].mxu0
        %1178 = vdwg.mxu0
        %v1179 = vadd.f32 %v328, %v1176
        %v1180 = vsel %vm340, %v1179, 0.0
        %1181 = vadd.xlane.f32.xlu0 %v1180
        %v1182 = vpop.xlane.xlu0 %1181
        %v1183 = vrcp.pop 32.0
        %v1184 = vmul.f32 %v1182, %v1183
        %v1185 = vsub.f32 %v1179, %v1184
        %v1186 = vmul.f32 %v1185, %v1185
        %v1187 = vsel %vm340, %v1186, 0.0
        %1188 = vadd.xlane.f32.xlu0 %v1187
        %v1189 = vpop.xlane.xlu0 %1188
        %v1190 = vmul.f32 %v1189, %v1183
        %v1191 = vadd.f32 %v1190, 1e-05
        %v1192 = vrsqrt.pop %v1191
        %v1193 = vmul.f32 %v1185, %v1192
        %v1194 = vlaneseq
        %v1195 = vshrl.u32 %v1194, 7
        %v1196 = vsub.s32 1, %v1195
        %v1197 = vrot.slane %v415, %v1196
        %v1198 = vmul.f32 %v1193, %v1197
        %v1199 = vlaneseq
        %v1200 = vshrl.u32 %v1199, 7
        %v1201 = vsub.s32 2, %v1200
        %v1202 = vrot.slane %v415, %v1201
        %v1203 = vadd.f32 %v1198, %v1202
        %v1204 = vld [vmem:[%s6] sm:$0xff]
        %v1205 = vld [vmem:[%s6 + $0x8] sm:$0xff]
        %v1206 = vld [vmem:[%s6 + $0x10] sm:$0xff]
        %v1207 = vld [vmem:[%s6 + $0x18] sm:$0xff]
        %v1208 = vld [vmem:[%s7] sm:$0x1]
        %v1210 = vlaneseq
        %v1211 = vshrl.u32 %v1210, 7
        %v1212 = vsub.s32 0, %v1211
        %v1213 = vrot.slane %v1208, %v1212
        %v1216 = vsel %vm340, %v1203, 0
        %1218 = vmatprep.subr.mxu0 0.0
        %1219 = vmatpush1.msra.mxu0 %v1204
        %1220 = vmatprep.subr.mxu0 0.0
        %1221 = vmatpush1.msra.mxu0 %v1205
        %1222 = vmatprep.subr.mxu0 0.0
        %1223 = vmatpush1.msra.mxu0 %v1206
        %1224 = vmatprep.subr.mxu0 0.0
        %1225 = vmatpush1.msra.mxu0 %v1207
        %1226 = vmatprep.subr.mxu0 0.0
        %1227 = vmatpush1.msra.mxu0 0.0
        %1228 = vmatprep.subr.mxu0 0.0
        %1229 = vmatpush1.msra.mxu0 0.0
        %1230 = vmatprep.subr.mxu0 0.0
        %1231 = vmatpush1.msra.mxu0 0.0
        %1232 = vmatprep.subr.mxu0 0.0
        %1233 = vmatpush1.msra.mxu0 0.0
        %1234 = vmatprep.subr.mxu0 0.0
        %1235 = vmatpush1.msra.mxu0 0.0
        %1236 = vmatprep.subr.mxu0 0.0
        %1237 = vmatpush1.msra.mxu0 0.0
        %1238 = vmatprep.subr.mxu0 0.0
        %1239 = vmatpush1.msra.mxu0 0.0
        %1240 = vmatprep.subr.mxu0 0.0
        %1241 = vmatpush1.msra.mxu0 0.0
        %1242 = vmatprep.subr.mxu0 0.0
        %1243 = vmatpush1.msra.mxu0 0.0
        %1244 = vmatprep.subr.mxu0 0.0
        %1245 = vmatpush1.msra.mxu0 0.0
        %1246 = vmatprep.subr.mxu0 0.0
        %1247 = vmatpush1.msra.mxu0 0.0
        %1248 = vmatprep.subr.mxu0 0.0
        %1249 = vmatpush1.msra.mxu0 0.0
        %1250 = vmatprep.subr.mxu0 0.0
        %1251 = vmatpush1.msra.mxu0 0.0
        %1252 = vmatprep.subr.mxu0 0.0
        %1253 = vmatpush1.msra.mxu0 0.0
        %1254 = vmatprep.subr.mxu0 0.0
        %1255 = vmatpush1.msra.mxu0 0.0
        %1256 = vmatprep.subr.mxu0 0.0
        %1257 = vmatpush1.msra.mxu0 0.0
        %1258 = vmatprep.subr.mxu0 0.0
        %1259 = vmatpush1.msra.mxu0 0.0
        %1260 = vmatprep.subr.mxu0 0.0
        %1261 = vmatpush1.msra.mxu0 0.0
        %1262 = vmatprep.subr.mxu0 0.0
        %1263 = vmatpush1.msra.mxu0 0.0
        %1264 = vmatprep.subr.mxu0 0.0
        %1265 = vmatpush1.msra.mxu0 0.0
        %1266 = vmatprep.subr.mxu0 0.0
        %1267 = vmatpush1.msra.mxu0 0.0
        %1268 = vmatprep.subr.mxu0 0.0
        %1269 = vmatpush1.msra.mxu0 0.0
        %1270 = vmatprep.subr.mxu0 0.0
        %1271 = vmatpush1.msra.mxu0 0.0
        %1272 = vmatprep.subr.mxu0 0.0
        %1273 = vmatpush1.msra.mxu0 0.0
        %1274 = vmatprep.subr.mxu0 0.0
        %1275 = vmatpush1.msra.mxu0 0.0
        %1276 = vmatprep.subr.mxu0 0.0
        %1277 = vmatpush1.msra.mxu0 0.0
        %1278 = vmatprep.subr.mxu0 0.0
        %1279 = vmatpush1.msra.mxu0 0.0
        %1280 = vmatprep.subr.mxu0 0.0
        %1281 = vmatpush1.msra.mxu0 0.0
        %1282 = vmatprep.mubr.f32.mxu0 0.0
        %1283 = vmatmul.mubr.f32.gmra.mrb[0].mxu0 %v1216
        %v1284 = vpop.f32.mrb[0].mxu0
        %v1285 = vadd.f32 %v1213, %v1284
        %v1286 = vpop.f32.mrb[0].mxu0
        %1287 = vdwg.mxu0
        %v1288 = vmax.f32 %v1285, 0.0
        %v1289 = vld [vmem:[%s8] sm:$0xff]
        %v1290 = vld [vmem:[%s8 + $0x8] sm:$0xff]
        %v1291 = vld [vmem:[%s8 + $0x10] sm:$0xff]
        %v1292 = vld [vmem:[%s8 + $0x18] sm:$0xff]
        %v1293 = vld [vmem:[%s8 + $0x20] sm:$0xff]
        %v1294 = vld [vmem:[%s8 + $0x28] sm:$0xff]
        %v1295 = vld [vmem:[%s8 + $0x30] sm:$0xff]
        %v1296 = vld [vmem:[%s8 + $0x38] sm:$0xff]
        %v1297 = vlaneseq
        %v1298 = vshrl.u32 %v1297, 7
        %v1299 = vsub.s32 3, %v1298
        %v1300 = vrot.slane %v415, %v1299
        %vm1301 = vcmask 523264
        %v1303 = vsel %vm1301, %v1288, 0
        %1305 = vmatprep.subr.mxu0 0.0
        %1306 = vmatpush1.msra.mxu0 %v1289
        %1307 = vmatprep.subr.mxu0 0.0
        %1308 = vmatpush1.msra.mxu0 %v1290
        %1309 = vmatprep.subr.mxu0 0.0
        %1310 = vmatpush1.msra.mxu0 %v1291
        %1311 = vmatprep.subr.mxu0 0.0
        %1312 = vmatpush1.msra.mxu0 %v1292
        %1313 = vmatprep.subr.mxu0 0.0
        %1314 = vmatpush1.msra.mxu0 %v1293
        %1315 = vmatprep.subr.mxu0 0.0
        %1316 = vmatpush1.msra.mxu0 %v1294
        %1317 = vmatprep.subr.mxu0 0.0
        %1318 = vmatpush1.msra.mxu0 %v1295
        %1319 = vmatprep.subr.mxu0 0.0
        %1320 = vmatpush1.msra.mxu0 %v1296
        %1321 = vmatprep.subr.mxu0 0.0
        %1322 = vmatpush1.msra.mxu0 0.0
        %1323 = vmatprep.subr.mxu0 0.0
        %1324 = vmatpush1.msra.mxu0 0.0
        %1325 = vmatprep.subr.mxu0 0.0
        %1326 = vmatpush1.msra.mxu0 0.0
        %1327 = vmatprep.subr.mxu0 0.0
        %1328 = vmatpush1.msra.mxu0 0.0
        %1329 = vmatprep.subr.mxu0 0.0
        %1330 = vmatpush1.msra.mxu0 0.0
        %1331 = vmatprep.subr.mxu0 0.0
        %1332 = vmatpush1.msra.mxu0 0.0
        %1333 = vmatprep.subr.mxu0 0.0
        %1334 = vmatpush1.msra.mxu0 0.0
        %1335 = vmatprep.subr.mxu0 0.0
        %1336 = vmatpush1.msra.mxu0 0.0
        %1337 = vmatprep.subr.mxu0 0.0
        %1338 = vmatpush1.msra.mxu0 0.0
        %1339 = vmatprep.subr.mxu0 0.0
        %1340 = vmatpush1.msra.mxu0 0.0
        %1341 = vmatprep.subr.mxu0 0.0
        %1342 = vmatpush1.msra.mxu0 0.0
        %1343 = vmatprep.subr.mxu0 0.0
        %1344 = vmatpush1.msra.mxu0 0.0
        %1345 = vmatprep.subr.mxu0 0.0
        %1346 = vmatpush1.msra.mxu0 0.0
        %1347 = vmatprep.subr.mxu0 0.0
        %1348 = vmatpush1.msra.mxu0 0.0
        %1349 = vmatprep.subr.mxu0 0.0
        %1350 = vmatpush1.msra.mxu0 0.0
        %1351 = vmatprep.subr.mxu0 0.0
        %1352 = vmatpush1.msra.mxu0 0.0
        %1353 = vmatprep.subr.mxu0 0.0
        %1354 = vmatpush1.msra.mxu0 0.0
        %1355 = vmatprep.subr.mxu0 0.0
        %1356 = vmatpush1.msra.mxu0 0.0
        %1357 = vmatprep.subr.mxu0 0.0
        %1358 = vmatpush1.msra.mxu0 0.0
        %1359 = vmatprep.subr.mxu0 0.0
        %1360 = vmatpush1.msra.mxu0 0.0
        %1361 = vmatprep.subr.mxu0 0.0
        %1362 = vmatpush1.msra.mxu0 0.0
        %1363 = vmatprep.subr.mxu0 0.0
        %1364 = vmatpush1.msra.mxu0 0.0
        %1365 = vmatprep.subr.mxu0 0.0
        %1366 = vmatpush1.msra.mxu0 0.0
        %1367 = vmatprep.subr.mxu0 0.0
        %1368 = vmatpush1.msra.mxu0 0.0
        %1369 = vmatprep.mubr.f32.mxu0 0.0
        %1370 = vmatmul.mubr.f32.gmra.mrb[0].mxu0 %v1303
        %v1371 = vpop.f32.mrb[0].mxu0
        %v1372 = vadd.f32 %v1300, %v1371
        %v1373 = vpop.f32.mrb[0].mxu0
        %1374 = vdwg.mxu0
        %v1375 = vadd.f32 %v1203, %v1372
        %v1376 = vsel %vm340, %v1375, 0.0
        %1377 = vadd.xlane.f32.xlu0 %v1376
        %v1378 = vpop.xlane.xlu0 %1377
        %v1379 = vmul.f32 %v1378, %v1183
        %v1380 = vsub.f32 %v1375, %v1379
        %v1381 = vmul.f32 %v1380, %v1380
        %v1382 = vsel %vm340, %v1381, 0.0
        %1383 = vadd.xlane.f32.xlu0 %v1382
        %v1384 = vpop.xlane.xlu0 %1383
        %v1385 = vmul.f32 %v1384, %v1183
        %v1386 = vadd.f32 %v1385, 1e-05
        %v1387 = vrsqrt.pop %v1386
        %v1388 = vmul.f32 %v1380, %v1387
        %v1389 = vmul.f32 %v1388, %v1197
        %v1390 = vadd.f32 %v1389, %v1202
        %1391 = vst.msk [vmem:[%s323] sm:$0xff] %vm340, %v1390
        %s1392 = sand.u32 %s225, 1
        %s1393 = scalar_lea.sflag [#allocation3], %s1392
        %s1394 = sand.u32 %s225, 1
        %s1395 = smul.addr %s1394, 8
        %s1396 = scalar_lea.vmem [#allocation2], %s1395
        // Predicated region
        $region57: #{encoder_layer.1} parent=55 // pred_check
          %p1397 = pneg %p235
        $region58: #{encoder_layer.1} parent=55 // pred_check_branch
          %1399 = sbr.rel (%p1397) target = $region60
        $region59: #{encoder_layer.1} parent=55 // pred_region
          %s1401 = ssub.s32 128, 128
          %1402 = vsyncadd %s1393, %s1401
          %s1403 = smul.addr %s23, 128
          %s1404 = scalar_lea.hbm %s9, %s1403
          %s1406 = sshll.u32 %s1396, 4
          %s1407 = int_to_ptr.vmem [resolvable:$true] %s1406
          %1409 = dma.vmem_to_hbm [thread:$0]  %s1407, 128, %s1404, %s1393
        $region60: #{encoder_layer.1} parent=55 // pred_fallthru
          _
      $region56: #{encoder_layer.1} parent=5 // pred_fallthru
        _
      %p1410 = scmp.le.s32.totalorder 2, %s18
      // Predicated region
      $region61: #{encoder_layer.1} parent=5 // pred_check
        %p1411 = pneg %p1410
      $region62: #{encoder_layer.1} parent=5 // pred_check_branch
        %1413 = sbr.rel (%p1411) target = $region64
      $region63: #{encoder_layer.1} parent=5 // pred_region
        %s1414 = ssub.s32 %s18, 2
        // Predicated region
        $region65: #{encoder_layer.1} parent=63 // pred_check
          %p1415 = pneg %p241
        $region66: #{encoder_layer.1} parent=63 // pred_check_branch
          %1417 = sbr.rel (%p1415) target = $region68
        $region67: #{encoder_layer.1} parent=63 // pred_region
          %s1418 = sand.u32 %s226, 1
          %s1419 = scalar_lea.sflag [#allocation3], %s1418
          %s1420 = sand.u32 %s226, 1
          %s1421 = smul.addr %s1420, 8
          %s1422 = scalar_lea.vmem [#allocation2], %s1421
          %1423 = dma.done %s1419, 128
        $region68: #{encoder_layer.1} parent=63 // pred_fallthru
          _
      $region64: #{encoder_layer.1} parent=5 // pred_fallthru
        _
    $region6: #{encoder_layer.1} parent=1 // loop_footer
      %s22 = sadd.s32 1, %s18
    $region7: #{encoder_layer.1} parent=1 // loop_footer_branch
      %17 = sbr.rel target = $region3
    $region8: #{encoder_layer.1} parent=1 // loop_exit
      _
    %1424 = vsyncpa [#allocation3], 1
    %s1425 = scalar_lea.sflag [#allocation3], 1
    %1426 = vsyncpa %s1425, 1

</llo_original>
